<compile_context>
chip_gen: v7x
topology: tpu7x:2x2x1
jax: 0.10.0
libtpu: 0.0.40
codegen_flags: <defaults>
</compile_context>

<pallas_src>
import functools
import math

import jax
import jax.numpy as jnp
from jax.experimental import pallas as pl
from jax.experimental.pallas import tpu as pltpu


# ----------------------------------------------------------------------------
# Pallas kernel: fused sea_net head (cdp_fc/bn/sigmoid + ts_fc/bn/relu stages)
# ----------------------------------------------------------------------------
def sea_head_kernel(b_real, feat_ref, sym_ref, wc1_ref, w12_ref, w23_ref,
                    wt3_ref, bn_ref, out_ref):
    eps = 1e-5
    b_pad = feat_ref.shape[0]
    pad_rows = b_pad - b_real
    inv_b = 1.0 / b_real

    # Row mask over the real batch.  Needed ONLY for cdp_bn2's statistics and
    # to re-zero the padded rows of `s` after cdp_bn2's sigmoid; every other
    # BN input already has zero padded rows.
    if pad_rows:
        m128 = (jax.lax.broadcasted_iota(jnp.int32, (b_pad, 128), 0)
                < b_real).astype(jnp.float32)
    else:
        m128 = None

    def bn_train(z, g, b, mask=None):
        # BatchNorm1d, training mode: mean / biased variance over the real
        # batch rows, two-pass variance.  Padded rows of the (masked) input
        # are zero, so they contribute exactly pad_rows * mu^2 to sum((z-mu)^2)
        # which is subtracted analytically (no extra mask multiplies).
        zm = z if mask is None else z * mask
        mu = jnp.sum(zm, axis=0, keepdims=True) * inv_b
        d = z - mu
        dm = d if mask is None else zm - mu
        var = jnp.sum(dm * dm, axis=0, keepdims=True) * inv_b
        if pad_rows:
            var = jnp.maximum(var - (pad_rows * inv_b) * (mu * mu), 0.0)
        return d * jax.lax.rsqrt(var + eps) * g + b

    def sigmoid(z):
        # Exact sigmoid with a single EUP op (tanh) instead of exp + recip.
        return 0.5 * jnp.tanh(0.5 * z) + 0.5

    # Packed BN gamma/beta: rows 0-1 = cdp_bn1 (512 wide); rows 2-9 = 128-wide
    # (zero in padded lanes so padded feature lanes stay exactly zero).
    gc1, bc1 = bn_ref[0:1, :], bn_ref[1:2, :]
    gc2, bc2 = bn_ref[2:3, 0:128], bn_ref[3:4, 0:128]
    gc3, bc3 = bn_ref[4:5, 0:128], bn_ref[5:6, 0:128]
    gt1, bt1 = bn_ref[6:7, 0:128], bn_ref[7:8, 0:128]
    gt2, bt2 = bn_ref[8:9, 0:128], bn_ref[9:10, 0:128]

    feat = feat_ref[...]       # (B_pad, 512) resnet18 features, f32
    sym = sym_ref[...]         # (B_pad, K_pad) symbol, f32 (K lane-padded)

    # --- stage 1: cdp_fc1 -> cdp_bn1 -> sigmoid; gate the features ----------
    s_pre = jnp.dot(sym.astype(jnp.bfloat16), wc1_ref[...],
                    preferred_element_type=jnp.float32)            # (B, 512)
    s1 = sigmoid(bn_train(s_pre, gc1, bc1))                        # padded rows nonzero
    xg1 = feat * s1                                                # padded rows stay 0

    # --- paired matmul: [xg1 ; s1] @ [wt1 | wc2]   (K=512, one N=256 push) --
    lhs = jnp.concatenate([xg1, s1], axis=0).astype(jnp.bfloat16)  # (2B, 512)
    r = jnp.dot(lhs, w12_ref[...], preferred_element_type=jnp.float32)
    x1_pre = r[:b_pad, 0:128]                                      # ts_fc1 output
    s2_pre = r[b_pad:, 128:256]                                    # cdp_fc2 output

    x1 = jnp.maximum(bn_train(x1_pre, gt1, bt1), 0.0)              # ts_bn1 + relu
    s2 = sigmoid(bn_train(s2_pre, gc2, bc2, m128))                 # cdp_bn2 + sigmoid
    if pad_rows:
        s2 = s2 * m128        # re-zero padded rows so downstream BN stats stay clean
    xg2 = x1 * s2

    # --- paired matmul: [xg2 ; s2] @ [wt2 | wc3]   (K=128, one N=256 push) --
    lhs = jnp.concatenate([xg2, s2], axis=0).astype(jnp.bfloat16)  # (2B, 128)
    r = jnp.dot(lhs, w23_ref[...], preferred_element_type=jnp.float32)
    x2_pre = r[:b_pad, 0:128]                                      # ts_fc2 output
    s3_pre = r[b_pad:, 128:256]                                    # cdp_fc3 output

    x2 = jnp.maximum(bn_train(x2_pre, gt2, bt2), 0.0)              # ts_bn2 + relu
    s3 = sigmoid(bn_train(s3_pre, gc3, bc3))                       # cdp_bn3 + sigmoid
    xg3 = x2 * s3

    # --- ts_fc3: lane-dense 128-wide store; wrapper slices [:, :2] ----------
    out_ref[...] = jnp.dot(xg3.astype(jnp.bfloat16), wt3_ref[...],
                           preferred_element_type=jnp.float32)


def prepare_head_params(head):
    """One-time prep (hoisted out of forward): transpose Linear weights to
    (in, out), zero-pad the 100/2-wide dims to 128 lanes and the symbol K dim
    to a 128 multiple, concat the stage-boundary weight pairs to N=256 (single
    MXU weight push on the 256-wide v6e/v7x MXU), cast matmul weights to bf16,
    and pack the 10 BN gamma/beta vectors into one (16, 512) f32 array."""
    def pad2(w, r, c):
        w = jnp.asarray(w, jnp.float32)
        out = jnp.zeros((r, c), jnp.float32)
        return out.at[:w.shape[0], :w.shape[1]].set(w)

    symbol_size = head["cdp_fc1"].shape[1]
    k_pad = -(-symbol_size // 128) * 128

    wc1 = pad2(head["cdp_fc1"].T, k_pad, 512)   # (sym, 512) -> (k_pad, 512)
    wt1 = pad2(head["ts_fc1"].T, 512, 128)      # (512, 100) -> (512, 128)
    wc2 = pad2(head["cdp_fc2"].T, 512, 128)     # (512, 100) -> (512, 128)
    wt2 = pad2(head["ts_fc2"].T, 128, 128)      # (100, 100) -> (128, 128)
    wc3 = pad2(head["cdp_fc3"].T, 128, 128)     # (100, 100) -> (128, 128)
    wt3 = pad2(head["ts_fc3"].T, 128, 128)      # (100, 2)   -> (128, 128)

    hp = {
        "wc1": wc1.astype(jnp.bfloat16),                                    # (k_pad, 512)
        "w12": jnp.concatenate([wt1, wc2], axis=1).astype(jnp.bfloat16),    # (512, 256)
        "w23": jnp.concatenate([wt2, wc3], axis=1).astype(jnp.bfloat16),    # (128, 256)
        "wt3": wt3.astype(jnp.bfloat16),                                    # (128, 128)
    }
    bn = jnp.zeros((16, 512), jnp.float32)
    for name, row in (("cdp_bn1", 0), ("cdp_bn2", 2), ("cdp_bn3", 4),
                      ("ts_bn1", 6), ("ts_bn2", 8)):
        g = head[name + "_g"]
        b = head[name + "_b"]
        bn = bn.at[row, :g.shape[0]].set(g)
        bn = bn.at[row + 1, :b.shape[0]].set(b)
    hp["bn"] = bn
    return hp


def sea_head_pallas(feat, symbol, hp):
    """feat: (B, 512) f32, symbol: (B, symbol_size) f32 -> (B, 2) f32."""
    B = feat.shape[0]
    b_pad = max(8, -(-B // 8) * 8)            # pad batch to a sublane multiple
    k_pad = hp["wc1"].shape[0]
    ss = symbol.shape[1]

    feat_p = feat
    if b_pad != B:
        feat_p = jnp.zeros((b_pad, feat.shape[1]), jnp.float32).at[:B].set(feat)
    # Lane-pad the symbol K dim (and the batch) with zeros; wc1's extra rows
    # are zero so the first matmul result is unchanged.
    sym_p = jnp.zeros((b_pad, k_pad), jnp.float32).at[:B, :ss].set(symbol)

    args = (feat_p, sym_p, hp["wc1"], hp["w12"], hp["w23"], hp["wt3"], hp["bn"])

    b2 = 2 * b_pad
    flops = (2 * b_pad * k_pad * 512 + 2 * b2 * 512 * 256
             + 2 * b2 * 128 * 256 + 2 * b_pad * 128 * 128)
    transcendentals = b_pad * (512 + 128 + 128) + 5 * 512     # tanh + BN rsqrt
    bytes_accessed = (sum(int(a.size) * a.dtype.itemsize for a in args)
                      + b_pad * 128 * 4)

    vmem = pl.BlockSpec(memory_space=pltpu.MemorySpace.VMEM)
    out = pl.pallas_call(
        functools.partial(sea_head_kernel, B),
        out_shape=jax.ShapeDtypeStruct((b_pad, 128), jnp.float32),
        in_specs=[vmem] * len(args),
        out_specs=vmem,
        compiler_params=pltpu.CompilerParams(vmem_limit_bytes=16 * 1024 * 1024),
        cost_estimate=pl.CostEstimate(flops=flops,
                                      transcendentals=transcendentals,
                                      bytes_accessed=bytes_accessed),
    )(*args)
    return out[:B, :2]


# ----------------------------------------------------------------------------
# Plain-JAX glue: resnet18 feature extractor (fe.eval(), no_grad semantics)
# ----------------------------------------------------------------------------
def conv2d(x, w, stride=1, padding=0):
    return jax.lax.conv_general_dilated(
        x, w,
        window_strides=(stride, stride),
        padding=[(padding, padding), (padding, padding)],
        dimension_numbers=("NCHW", "OIHW", "NCHW"))


def bn2d_eval(x, bn, eps=1e-5):
    sh = (1, -1, 1, 1)
    return ((x - bn["rm"].reshape(sh)) / jnp.sqrt(bn["rv"].reshape(sh) + eps)
            * bn["g"].reshape(sh) + bn["b"].reshape(sh))


def maxpool_3x3_s2_p1(x):
    return jax.lax.reduce_window(
        x, -jnp.inf, jax.lax.max,
        window_dimensions=(1, 1, 3, 3),
        window_strides=(1, 1, 2, 2),
        padding=[(0, 0), (0, 0), (1, 1), (1, 1)])


def basic_block(x, p):
    identity = x
    out = conv2d(x, p["conv1"], stride=p["stride"], padding=1)
    out = jnp.maximum(bn2d_eval(out, p["bn1"]), 0.0)
    out = conv2d(out, p["conv2"], stride=1, padding=1)
    out = bn2d_eval(out, p["bn2"])
    if "down_conv" in p:
        identity = bn2d_eval(conv2d(x, p["down_conv"], stride=p["stride"], padding=0),
                             p["down_bn"])
    return jnp.maximum(out + identity, 0.0)


def resnet18_features(x, fe):
    x = conv2d(x, fe["conv1"], stride=2, padding=3)
    x = jnp.maximum(bn2d_eval(x, fe["bn1"]), 0.0)
    x = maxpool_3x3_s2_p1(x)
    for layer in ("layer1", "layer2", "layer3", "layer4"):
        for blk in fe[layer]:
            x = basic_block(x, blk)
    x = jnp.mean(x, axis=(2, 3))  # adaptive avgpool(1,1) + flatten -> (B, 512)
    return x


# ----------------------------------------------------------------------------
# Deterministic parameter initialization (shapes follow sea_net.__init__)
# ----------------------------------------------------------------------------
def _init_conv(key, out_c, in_c, k):
    fan_in = in_c * k * k
    return jax.random.normal(key, (out_c, in_c, k, k), jnp.float32) * math.sqrt(2.0 / fan_in)


def _init_bn2d(c):
    return {"g": jnp.ones((c,), jnp.float32), "b": jnp.zeros((c,), jnp.float32),
            "rm": jnp.zeros((c,), jnp.float32), "rv": jnp.ones((c,), jnp.float32)}


def _init_block(key, in_c, out_c, stride):
    k1, k2, k3 = jax.random.split(key, 3)
    p = {"conv1": _init_conv(k1, out_c, in_c, 3), "bn1": _init_bn2d(out_c),
         "conv2": _init_conv(k2, out_c, out_c, 3), "bn2": _init_bn2d(out_c),
         "stride": stride}
    if stride != 1 or in_c != out_c:
        p["down_conv"] = _init_conv(k3, out_c, in_c, 1)
        p["down_bn"] = _init_bn2d(out_c)
    return p


def _init_linear(key, out_f, in_f):
    bound = 1.0 / math.sqrt(in_f)
    return jax.random.uniform(key, (out_f, in_f), jnp.float32, -bound, bound)


def init_params(key, symbol_size, dim=512):
    keys = jax.random.split(key, 32)
    ki = iter(range(32))

    fe = {"conv1": _init_conv(keys[next(ki)], 64, 3, 7), "bn1": _init_bn2d(64)}
    cfg = {"layer1": (64, 64, 1), "layer2": (64, 128, 2),
           "layer3": (128, 256, 2), "layer4": (256, 512, 2)}
    for name, (in_c, out_c, stride) in cfg.items():
        fe[name] = [_init_block(keys[next(ki)], in_c, out_c, stride),
                    _init_block(keys[next(ki)], out_c, out_c, 1)]

    head = {
        # Linear weights, PyTorch layout (out_features, in_features), no bias.
        "ts_fc1": _init_linear(keys[next(ki)], 100, dim),
        "ts_fc2": _init_linear(keys[next(ki)], 100, 100),
        "ts_fc3": _init_linear(keys[next(ki)], 2, 100),
        "cdp_fc1": _init_linear(keys[next(ki)], dim, symbol_size),
        "cdp_fc2": _init_linear(keys[next(ki)], 100, dim),
        "cdp_fc3": _init_linear(keys[next(ki)], 100, 100),
    }
    # BatchNorm1d affine params (PyTorch default init: weight=1, bias=0).
    for name, c in (("cdp_bn1", dim), ("cdp_bn2", 100), ("cdp_bn3", 100),
                    ("ts_bn1", 100), ("ts_bn2", 100)):
        head[name + "_g"] = jnp.ones((c,), jnp.float32)
        head[name + "_b"] = jnp.zeros((c,), jnp.float32)

    # Unused-in-forward parameters from __init__ (kept for shape fidelity).
    extra = {
        "symbol_set": jax.random.uniform(keys[next(ki)], (10, symbol_size), jnp.float32),
        "t": jax.random.uniform(keys[next(ki)], (1,), jnp.float32),
        "new_symbol": jax.random.uniform(keys[next(ki)], (12, symbol_size), jnp.float32),
    }
    return {"fe": fe, "head": head, "extra": extra}


def sea_net_forward(x, symbol, fe_params, head_prepped):
    # fix_fe=True -> fe.eval() + no_grad: eval-mode resnet18 feature extraction (glue).
    feat = resnet18_features(x, fe_params)                 # (B, 512)
    # Fused sea_net head in a single Pallas TPU kernel.
    return sea_head_pallas(feat, symbol, head_prepped)     # (B, 2)


if __name__ == "__main__":
    key = jax.random.PRNGKey(0)
    B, C, H, W = 2, 3, 32, 32
    symbol_size = 32

    kx, ks, kp = jax.random.split(key, 3)
    x = jax.random.normal(kx, (B, C, H, W), jnp.float32)
    symbol = jax.random.uniform(ks, (B, symbol_size), jnp.float32)

    params = init_params(kp, symbol_size)
    # One-time weight prep: transpose, lane-pad, bf16-cast, N=256 concat, pack.
    head_prepped = prepare_head_params(params["head"])

    out = sea_net_forward(x, symbol, params["fe"], head_prepped)
    out = jax.block_until_ready(out)
    assert out.shape == (B, 2) and out.dtype == jnp.float32
    assert bool(jnp.all(jnp.isfinite(out)))
    print("KERNEL_OK")
</pallas_src>

<mosaic_0001>
module attributes {stable_mosaic.version = 11 : i64} {
  func.func @sea_head_kernel(%arg0: memref<8x512xf32, #tpu.memory_space<vmem>>, %arg1: memref<8x128xf32, #tpu.memory_space<vmem>>, %arg2: memref<128x512xbf16, #tpu.memory_space<vmem>>, %arg3: memref<512x256xbf16, #tpu.memory_space<vmem>>, %arg4: memref<128x256xbf16, #tpu.memory_space<vmem>>, %arg5: memref<128x128xbf16, #tpu.memory_space<vmem>>, %arg6: memref<16x512xf32, #tpu.memory_space<vmem>>, %arg7: memref<8x128xf32, #tpu.memory_space<vmem>>) attributes {dimension_semantics = [], scalar_prefetch = 0 : i64, scratch_operands = 0 : i64, tpu.core_type = #tpu.core_type<tc>} {
    %0 = tpu.iota {dimensions = array<i32: 0>} : vector<8x128xi32>
    %c2_i32 = arith.constant 2 : i32
    %1 = vector.broadcast %c2_i32 : i32 to vector<8x128xi32>
    %2 = arith.cmpi slt, %0, %1 : vector<8x128xi32>
    %3 = arith.extui %2 : vector<8x128xi1> to vector<8x128xi32>
    %4 = arith.sitofp %3 : vector<8x128xi32> to vector<8x128xf32>
    %c0 = arith.constant 0 : index
    %c0_0 = arith.constant 0 : index
    %5 = vector.load %arg6[%c0, %c0_0] : memref<16x512xf32, #tpu.memory_space<vmem>>, vector<1x512xf32>
    %c1 = arith.constant 1 : index
    %c0_1 = arith.constant 0 : index
    %6 = vector.load %arg6[%c1, %c0_1] : memref<16x512xf32, #tpu.memory_space<vmem>>, vector<1x512xf32>
    %c2 = arith.constant 2 : index
    %c0_2 = arith.constant 0 : index
    %7 = vector.load %arg6[%c2, %c0_2] : memref<16x512xf32, #tpu.memory_space<vmem>>, vector<1x128xf32>
    %c3 = arith.constant 3 : index
    %c0_3 = arith.constant 0 : index
    %8 = vector.load %arg6[%c3, %c0_3] : memref<16x512xf32, #tpu.memory_space<vmem>>, vector<1x128xf32>
    %c4 = arith.constant 4 : index
    %c0_4 = arith.constant 0 : index
    %9 = vector.load %arg6[%c4, %c0_4] : memref<16x512xf32, #tpu.memory_space<vmem>>, vector<1x128xf32>
    %c5 = arith.constant 5 : index
    %c0_5 = arith.constant 0 : index
    %10 = vector.load %arg6[%c5, %c0_5] : memref<16x512xf32, #tpu.memory_space<vmem>>, vector<1x128xf32>
    %c6 = arith.constant 6 : index
    %c0_6 = arith.constant 0 : index
    %11 = vector.load %arg6[%c6, %c0_6] : memref<16x512xf32, #tpu.memory_space<vmem>>, vector<1x128xf32>
    %c7 = arith.constant 7 : index
    %c0_7 = arith.constant 0 : index
    %12 = vector.load %arg6[%c7, %c0_7] : memref<16x512xf32, #tpu.memory_space<vmem>>, vector<1x128xf32>
    %c8 = arith.constant 8 : index
    %c0_8 = arith.constant 0 : index
    %13 = vector.load %arg6[%c8, %c0_8] : memref<16x512xf32, #tpu.memory_space<vmem>>, vector<1x128xf32>
    %c9 = arith.constant 9 : index
    %c0_9 = arith.constant 0 : index
    %14 = vector.load %arg6[%c9, %c0_9] : memref<16x512xf32, #tpu.memory_space<vmem>>, vector<1x128xf32>
    %c0_10 = arith.constant 0 : index
    %c0_11 = arith.constant 0 : index
    %15 = vector.load %arg0[%c0_10, %c0_11] : memref<8x512xf32, #tpu.memory_space<vmem>>, vector<8x512xf32>
    %c0_12 = arith.constant 0 : index
    %c0_13 = arith.constant 0 : index
    %16 = vector.load %arg1[%c0_12, %c0_13] : memref<8x128xf32, #tpu.memory_space<vmem>>, vector<8x128xf32>
    %17 = arith.truncf %16 : vector<8x128xf32> to vector<8x128xbf16>
    %c0_14 = arith.constant 0 : index
    %c0_15 = arith.constant 0 : index
    %18 = vector.load %arg2[%c0_14, %c0_15] : memref<128x512xbf16, #tpu.memory_space<vmem>>, vector<128x512xbf16>
    %cst = arith.constant dense<0.000000e+00> : vector<8x512xf32>
    %19 = tpu.matmul %17, %18, %cst {dimension_numbers = #tpu.dot_dimension_numbers<[1], [0], [0], [1], [0, 0, 1, 1], [], []>} : vector<8x128xbf16>, vector<128x512xbf16>, vector<8x512xf32> -> vector<8x512xf32>
    %cst_16 = arith.constant dense<0.000000e+00> : vector<512xf32>
    %20 = vector.multi_reduction <add>, %19, %cst_16 [0] : vector<8x512xf32> to vector<512xf32>
    %21 = vector.shape_cast %20 : vector<512xf32> to vector<1x512xf32>
    %cst_17 = arith.constant 5.000000e-01 : f32
    %22 = vector.broadcast %cst_17 : f32 to vector<1x512xf32>
    %23 = arith.mulf %21, %22 : vector<1x512xf32>
    %24 = vector.broadcast %23 : vector<1x512xf32> to vector<8x512xf32>
    %25 = arith.subf %19, %24 : vector<8x512xf32>
    %26 = arith.mulf %25, %25 : vector<8x512xf32>
    %cst_18 = arith.constant dense<0.000000e+00> : vector<512xf32>
    %27 = vector.multi_reduction <add>, %26, %cst_18 [0] : vector<8x512xf32> to vector<512xf32>
    %28 = vector.shape_cast %27 : vector<512xf32> to vector<1x512xf32>
    %cst_19 = arith.constant 5.000000e-01 : f32
    %29 = vector.broadcast %cst_19 : f32 to vector<1x512xf32>
    %30 = arith.mulf %28, %29 : vector<1x512xf32>
    %31 = arith.mulf %23, %23 : vector<1x512xf32>
    %cst_20 = arith.constant 3.000000e+00 : f32
    %32 = vector.broadcast %cst_20 : f32 to vector<1x512xf32>
    %33 = arith.mulf %32, %31 : vector<1x512xf32>
    %34 = arith.subf %30, %33 : vector<1x512xf32>
    %cst_21 = arith.constant 0.000000e+00 : f32
    %35 = vector.broadcast %cst_21 : f32 to vector<1x512xf32>
    %36 = arith.maximumf %34, %35 : vector<1x512xf32>
    %cst_22 = arith.constant 9.99999974E-6 : f32
    %37 = vector.broadcast %cst_22 : f32 to vector<1x512xf32>
    %38 = arith.addf %36, %37 : vector<1x512xf32>
    %39 = math.rsqrt %38 : vector<1x512xf32>
    %40 = vector.broadcast %39 : vector<1x512xf32> to vector<8x512xf32>
    %41 = arith.mulf %25, %40 : vector<8x512xf32>
    %42 = vector.broadcast %5 : vector<1x512xf32> to vector<8x512xf32>
    %43 = arith.mulf %41, %42 : vector<8x512xf32>
    %44 = vector.broadcast %6 : vector<1x512xf32> to vector<8x512xf32>
    %45 = arith.addf %43, %44 : vector<8x512xf32>
    %cst_23 = arith.constant 5.000000e-01 : f32
    %46 = vector.broadcast %cst_23 : f32 to vector<8x512xf32>
    %47 = arith.mulf %46, %45 : vector<8x512xf32>
    %48 = math.tanh %47 : vector<8x512xf32>
    %cst_24 = arith.constant 5.000000e-01 : f32
    %49 = vector.broadcast %cst_24 : f32 to vector<8x512xf32>
    %50 = arith.mulf %49, %48 : vector<8x512xf32>
    %cst_25 = arith.constant 5.000000e-01 : f32
    %51 = vector.broadcast %cst_25 : f32 to vector<8x512xf32>
    %52 = arith.addf %50, %51 : vector<8x512xf32>
    %53 = arith.mulf %15, %52 : vector<8x512xf32>
    %54 = tpu.concatenate %53, %52 in 0 : vector<8x512xf32>, vector<8x512xf32> -> vector<16x512xf32>
    %55 = arith.truncf %54 : vector<16x512xf32> to vector<16x512xbf16>
    %c0_26 = arith.constant 0 : index
    %c0_27 = arith.constant 0 : index
    %56 = vector.load %arg3[%c0_26, %c0_27] : memref<512x256xbf16, #tpu.memory_space<vmem>>, vector<512x256xbf16>
    %cst_28 = arith.constant dense<0.000000e+00> : vector<16x256xf32>
    %57 = tpu.matmul %55, %56, %cst_28 {dimension_numbers = #tpu.dot_dimension_numbers<[1], [0], [0], [1], [0, 0, 1, 1], [], []>} : vector<16x512xbf16>, vector<512x256xbf16>, vector<16x256xf32> -> vector<16x256xf32>
    %58 = vector.extract_strided_slice %57 {offsets = [0, 0], sizes = [8, 128], strides = [1, 1]} : vector<16x256xf32> to vector<8x128xf32>
    %59 = vector.extract_strided_slice %57 {offsets = [8, 128], sizes = [8, 128], strides = [1, 1]} : vector<16x256xf32> to vector<8x128xf32>
    %cst_29 = arith.constant dense<0.000000e+00> : vector<128xf32>
    %60 = vector.multi_reduction <add>, %58, %cst_29 [0] : vector<8x128xf32> to vector<128xf32>
    %61 = vector.shape_cast %60 : vector<128xf32> to vector<1x128xf32>
    %cst_30 = arith.constant 5.000000e-01 : f32
    %62 = vector.broadcast %cst_30 : f32 to vector<1x128xf32>
    %63 = arith.mulf %61, %62 : vector<1x128xf32>
    %64 = vector.broadcast %63 : vector<1x128xf32> to vector<8x128xf32>
    %65 = arith.subf %58, %64 : vector<8x128xf32>
    %66 = arith.mulf %65, %65 : vector<8x128xf32>
    %cst_31 = arith.constant dense<0.000000e+00> : vector<128xf32>
    %67 = vector.multi_reduction <add>, %66, %cst_31 [0] : vector<8x128xf32> to vector<128xf32>
    %68 = vector.shape_cast %67 : vector<128xf32> to vector<1x128xf32>
    %cst_32 = arith.constant 5.000000e-01 : f32
    %69 = vector.broadcast %cst_32 : f32 to vector<1x128xf32>
    %70 = arith.mulf %68, %69 : vector<1x128xf32>
    %71 = arith.mulf %63, %63 : vector<1x128xf32>
    %cst_33 = arith.constant 3.000000e+00 : f32
    %72 = vector.broadcast %cst_33 : f32 to vector<1x128xf32>
    %73 = arith.mulf %72, %71 : vector<1x128xf32>
    %74 = arith.subf %70, %73 : vector<1x128xf32>
    %cst_34 = arith.constant 0.000000e+00 : f32
    %75 = vector.broadcast %cst_34 : f32 to vector<1x128xf32>
    %76 = arith.maximumf %74, %75 : vector<1x128xf32>
    %cst_35 = arith.constant 9.99999974E-6 : f32
    %77 = vector.broadcast %cst_35 : f32 to vector<1x128xf32>
    %78 = arith.addf %76, %77 : vector<1x128xf32>
    %79 = math.rsqrt %78 : vector<1x128xf32>
    %80 = vector.broadcast %79 : vector<1x128xf32> to vector<8x128xf32>
    %81 = arith.mulf %65, %80 : vector<8x128xf32>
    %82 = vector.broadcast %11 : vector<1x128xf32> to vector<8x128xf32>
    %83 = arith.mulf %81, %82 : vector<8x128xf32>
    %84 = vector.broadcast %12 : vector<1x128xf32> to vector<8x128xf32>
    %85 = arith.addf %83, %84 : vector<8x128xf32>
    %cst_36 = arith.constant 0.000000e+00 : f32
    %86 = vector.broadcast %cst_36 : f32 to vector<8x128xf32>
    %87 = arith.maximumf %85, %86 : vector<8x128xf32>
    %88 = arith.mulf %59, %4 : vector<8x128xf32>
    %cst_37 = arith.constant dense<0.000000e+00> : vector<128xf32>
    %89 = vector.multi_reduction <add>, %88, %cst_37 [0] : vector<8x128xf32> to vector<128xf32>
    %90 = vector.shape_cast %89 : vector<128xf32> to vector<1x128xf32>
    %cst_38 = arith.constant 5.000000e-01 : f32
    %91 = vector.broadcast %cst_38 : f32 to vector<1x128xf32>
    %92 = arith.mulf %90, %91 : vector<1x128xf32>
    %93 = vector.broadcast %92 : vector<1x128xf32> to vector<8x128xf32>
    %94 = arith.subf %59, %93 : vector<8x128xf32>
    %95 = vector.broadcast %92 : vector<1x128xf32> to vector<8x128xf32>
    %96 = arith.subf %88, %95 : vector<8x128xf32>
    %97 = arith.mulf %96, %96 : vector<8x128xf32>
    %cst_39 = arith.constant dense<0.000000e+00> : vector<128xf32>
    %98 = vector.multi_reduction <add>, %97, %cst_39 [0] : vector<8x128xf32> to vector<128xf32>
    %99 = vector.shape_cast %98 : vector<128xf32> to vector<1x128xf32>
    %cst_40 = arith.constant 5.000000e-01 : f32
    %100 = vector.broadcast %cst_40 : f32 to vector<1x128xf32>
    %101 = arith.mulf %99, %100 : vector<1x128xf32>
    %102 = arith.mulf %92, %92 : vector<1x128xf32>
    %cst_41 = arith.constant 3.000000e+00 : f32
    %103 = vector.broadcast %cst_41 : f32 to vector<1x128xf32>
    %104 = arith.mulf %103, %102 : vector<1x128xf32>
    %105 = arith.subf %101, %104 : vector<1x128xf32>
    %cst_42 = arith.constant 0.000000e+00 : f32
    %106 = vector.broadcast %cst_42 : f32 to vector<1x128xf32>
    %107 = arith.maximumf %105, %106 : vector<1x128xf32>
    %cst_43 = arith.constant 9.99999974E-6 : f32
    %108 = vector.broadcast %cst_43 : f32 to vector<1x128xf32>
    %109 = arith.addf %107, %108 : vector<1x128xf32>
    %110 = math.rsqrt %109 : vector<1x128xf32>
    %111 = vector.broadcast %110 : vector<1x128xf32> to vector<8x128xf32>
    %112 = arith.mulf %94, %111 : vector<8x128xf32>
    %113 = vector.broadcast %7 : vector<1x128xf32> to vector<8x128xf32>
    %114 = arith.mulf %112, %113 : vector<8x128xf32>
    %115 = vector.broadcast %8 : vector<1x128xf32> to vector<8x128xf32>
    %116 = arith.addf %114, %115 : vector<8x128xf32>
    %cst_44 = arith.constant 5.000000e-01 : f32
    %117 = vector.broadcast %cst_44 : f32 to vector<8x128xf32>
    %118 = arith.mulf %117, %116 : vector<8x128xf32>
    %119 = math.tanh %118 : vector<8x128xf32>
    %cst_45 = arith.constant 5.000000e-01 : f32
    %120 = vector.broadcast %cst_45 : f32 to vector<8x128xf32>
    %121 = arith.mulf %120, %119 : vector<8x128xf32>
    %cst_46 = arith.constant 5.000000e-01 : f32
    %122 = vector.broadcast %cst_46 : f32 to vector<8x128xf32>
    %123 = arith.addf %121, %122 : vector<8x128xf32>
    %124 = arith.mulf %123, %4 : vector<8x128xf32>
    %125 = arith.mulf %87, %124 : vector<8x128xf32>
    %126 = tpu.concatenate %125, %124 in 0 : vector<8x128xf32>, vector<8x128xf32> -> vector<16x128xf32>
    %127 = arith.truncf %126 : vector<16x128xf32> to vector<16x128xbf16>
    %c0_47 = arith.constant 0 : index
    %c0_48 = arith.constant 0 : index
    %128 = vector.load %arg4[%c0_47, %c0_48] : memref<128x256xbf16, #tpu.memory_space<vmem>>, vector<128x256xbf16>
    %cst_49 = arith.constant dense<0.000000e+00> : vector<16x256xf32>
    %129 = tpu.matmul %127, %128, %cst_49 {dimension_numbers = #tpu.dot_dimension_numbers<[1], [0], [0], [1], [0, 0, 1, 1], [], []>} : vector<16x128xbf16>, vector<128x256xbf16>, vector<16x256xf32> -> vector<16x256xf32>
    %130 = vector.extract_strided_slice %129 {offsets = [0, 0], sizes = [8, 128], strides = [1, 1]} : vector<16x256xf32> to vector<8x128xf32>
    %131 = vector.extract_strided_slice %129 {offsets = [8, 128], sizes = [8, 128], strides = [1, 1]} : vector<16x256xf32> to vector<8x128xf32>
    %cst_50 = arith.constant dense<0.000000e+00> : vector<128xf32>
    %132 = vector.multi_reduction <add>, %130, %cst_50 [0] : vector<8x128xf32> to vector<128xf32>
    %133 = vector.shape_cast %132 : vector<128xf32> to vector<1x128xf32>
    %cst_51 = arith.constant 5.000000e-01 : f32
    %134 = vector.broadcast %cst_51 : f32 to vector<1x128xf32>
    %135 = arith.mulf %133, %134 : vector<1x128xf32>
    %136 = vector.broadcast %135 : vector<1x128xf32> to vector<8x128xf32>
    %137 = arith.subf %130, %136 : vector<8x128xf32>
    %138 = arith.mulf %137, %137 : vector<8x128xf32>
    %cst_52 = arith.constant dense<0.000000e+00> : vector<128xf32>
    %139 = vector.multi_reduction <add>, %138, %cst_52 [0] : vector<8x128xf32> to vector<128xf32>
    %140 = vector.shape_cast %139 : vector<128xf32> to vector<1x128xf32>
    %cst_53 = arith.constant 5.000000e-01 : f32
    %141 = vector.broadcast %cst_53 : f32 to vector<1x128xf32>
    %142 = arith.mulf %140, %141 : vector<1x128xf32>
    %143 = arith.mulf %135, %135 : vector<1x128xf32>
    %cst_54 = arith.constant 3.000000e+00 : f32
    %144 = vector.broadcast %cst_54 : f32 to vector<1x128xf32>
    %145 = arith.mulf %144, %143 : vector<1x128xf32>
    %146 = arith.subf %142, %145 : vector<1x128xf32>
    %cst_55 = arith.constant 0.000000e+00 : f32
    %147 = vector.broadcast %cst_55 : f32 to vector<1x128xf32>
    %148 = arith.maximumf %146, %147 : vector<1x128xf32>
    %cst_56 = arith.constant 9.99999974E-6 : f32
    %149 = vector.broadcast %cst_56 : f32 to vector<1x128xf32>
    %150 = arith.addf %148, %149 : vector<1x128xf32>
    %151 = math.rsqrt %150 : vector<1x128xf32>
    %152 = vector.broadcast %151 : vector<1x128xf32> to vector<8x128xf32>
    %153 = arith.mulf %137, %152 : vector<8x128xf32>
    %154 = vector.broadcast %13 : vector<1x128xf32> to vector<8x128xf32>
    %155 = arith.mulf %153, %154 : vector<8x128xf32>
    %156 = vector.broadcast %14 : vector<1x128xf32> to vector<8x128xf32>
    %157 = arith.addf %155, %156 : vector<8x128xf32>
    %cst_57 = arith.constant 0.000000e+00 : f32
    %158 = vector.broadcast %cst_57 : f32 to vector<8x128xf32>
    %159 = arith.maximumf %157, %158 : vector<8x128xf32>
    %cst_58 = arith.constant dense<0.000000e+00> : vector<128xf32>
    %160 = vector.multi_reduction <add>, %131, %cst_58 [0] : vector<8x128xf32> to vector<128xf32>
    %161 = vector.shape_cast %160 : vector<128xf32> to vector<1x128xf32>
    %cst_59 = arith.constant 5.000000e-01 : f32
    %162 = vector.broadcast %cst_59 : f32 to vector<1x128xf32>
    %163 = arith.mulf %161, %162 : vector<1x128xf32>
    %164 = vector.broadcast %163 : vector<1x128xf32> to vector<8x128xf32>
    %165 = arith.subf %131, %164 : vector<8x128xf32>
    %166 = arith.mulf %165, %165 : vector<8x128xf32>
    %cst_60 = arith.constant dense<0.000000e+00> : vector<128xf32>
    %167 = vector.multi_reduction <add>, %166, %cst_60 [0] : vector<8x128xf32> to vector<128xf32>
    %168 = vector.shape_cast %167 : vector<128xf32> to vector<1x128xf32>
    %cst_61 = arith.constant 5.000000e-01 : f32
    %169 = vector.broadcast %cst_61 : f32 to vector<1x128xf32>
    %170 = arith.mulf %168, %169 : vector<1x128xf32>
    %171 = arith.mulf %163, %163 : vector<1x128xf32>
    %cst_62 = arith.constant 3.000000e+00 : f32
    %172 = vector.broadcast %cst_62 : f32 to vector<1x128xf32>
    %173 = arith.mulf %172, %171 : vector<1x128xf32>
    %174 = arith.subf %170, %173 : vector<1x128xf32>
    %cst_63 = arith.constant 0.000000e+00 : f32
    %175 = vector.broadcast %cst_63 : f32 to vector<1x128xf32>
    %176 = arith.maximumf %174, %175 : vector<1x128xf32>
    %cst_64 = arith.constant 9.99999974E-6 : f32
    %177 = vector.broadcast %cst_64 : f32 to vector<1x128xf32>
    %178 = arith.addf %176, %177 : vector<1x128xf32>
    %179 = math.rsqrt %178 : vector<1x128xf32>
    %180 = vector.broadcast %179 : vector<1x128xf32> to vector<8x128xf32>
    %181 = arith.mulf %165, %180 : vector<8x128xf32>
    %182 = vector.broadcast %9 : vector<1x128xf32> to vector<8x128xf32>
    %183 = arith.mulf %181, %182 : vector<8x128xf32>
    %184 = vector.broadcast %10 : vector<1x128xf32> to vector<8x128xf32>
    %185 = arith.addf %183, %184 : vector<8x128xf32>
    %cst_65 = arith.constant 5.000000e-01 : f32
    %186 = vector.broadcast %cst_65 : f32 to vector<8x128xf32>
    %187 = arith.mulf %186, %185 : vector<8x128xf32>
    %188 = math.tanh %187 : vector<8x128xf32>
    %cst_66 = arith.constant 5.000000e-01 : f32
    %189 = vector.broadcast %cst_66 : f32 to vector<8x128xf32>
    %190 = arith.mulf %189, %188 : vector<8x128xf32>
    %cst_67 = arith.constant 5.000000e-01 : f32
    %191 = vector.broadcast %cst_67 : f32 to vector<8x128xf32>
    %192 = arith.addf %190, %191 : vector<8x128xf32>
    %193 = arith.mulf %159, %192 : vector<8x128xf32>
    %194 = arith.truncf %193 : vector<8x128xf32> to vector<8x128xbf16>
    %c0_68 = arith.constant 0 : index
    %c0_69 = arith.constant 0 : index
    %195 = vector.load %arg5[%c0_68, %c0_69] : memref<128x128xbf16, #tpu.memory_space<vmem>>, vector<128x128xbf16>
    %cst_70 = arith.constant dense<0.000000e+00> : vector<8x128xf32>
    %196 = tpu.matmul %194, %195, %cst_70 {dimension_numbers = #tpu.dot_dimension_numbers<[1], [0], [0], [1], [0, 0, 1, 1], [], []>} : vector<8x128xbf16>, vector<128x128xbf16>, vector<8x128xf32> -> vector<8x128xf32>
    %c0_71 = arith.constant 0 : index
    %c0_72 = arith.constant 0 : index
    %197 = vector.load %arg7[%c0_71, %c0_72] : memref<8x128xf32, #tpu.memory_space<vmem>>, vector<8x128xf32>
    tpu.vector_store %arg7[%c0_71, %c0_72], %196 {strides = array<i32>} : memref<8x128xf32, #tpu.memory_space<vmem>>, vector<8x128xf32>,
    return
  }
}

</mosaic_0001>

<llo_original>
// kernel: tpu_custom_call.1
$region0: #{tpu_custom_call.1}
  #allocation0 [shape = 'u32[]', space=smem, size = 0x4, offset = 0x4, fixed_abs, tag = 'smem constant byte address 0x4 - core index']
  #allocation1 [shape = 'u32[144,128]{1,0:T(1,128)}', space=vmem, size = 0x12000, scoped, tag = 'internal scratch']
  %s0 = inlined_call_operand.hbm [shape: f32[8,512], index: 0, kind: input, shape index: {}]
  %s1 = inlined_call_operand.hbm [shape: f32[8,128], index: 1, kind: input, shape index: {}]
  %s2 = inlined_call_operand.hbm [shape: bf16[128,512], index: 2, kind: input, shape index: {}]
  %s3 = inlined_call_operand.hbm [shape: bf16[512,256], index: 3, kind: input, shape index: {}]
  %s4 = inlined_call_operand.hbm [shape: bf16[128,256], index: 4, kind: input, shape index: {}]
  %s5 = inlined_call_operand.hbm [shape: bf16[128,128], index: 5, kind: input, shape index: {}]
  %s6 = inlined_call_operand.hbm [shape: f32[16,512], index: 6, kind: input, shape index: {}]
  %s7 = inlined_call_operand.hbm [shape: f32[8,128], index: 7, kind: output, shape index: {}]
  %s8 = sld [smem:[#allocation0]]
  $region66: #{tpu_custom_call.1} parent=0
    _
  %s10 = ssub.s32 1, %s8
  %s11 = scalar_select 0, %s10, %s8
  $region1: #{tpu_custom_call.1} parent=0
    #allocation2 [shape = 'u8[16384]{0}', space=vmem, size = 0x4000, scoped, tag = 'input window, operand 0, single buffered']
    #allocation3 [shape = 's32[1]{0}', space=sflag, size = 0x4, scoped, tag = 'scoped memory for tpu_custom_call.1']
    #allocation4 [shape = 's32[1]{0}', space=sflag, size = 0x4, scoped, tag = 'scoped memory for tpu_custom_call.1']
    #allocation5 [shape = 'u8[4096]{0}', space=vmem, size = 0x1000, scoped, tag = 'input window, operand 1, single buffered']
    #allocation6 [shape = 's32[1]{0}', space=sflag, size = 0x4, scoped, tag = 'scoped memory for tpu_custom_call.1']
    #allocation7 [shape = 'u8[131072]{0}', space=vmem, size = 0x20000, scoped, tag = 'input window, operand 2, single buffered']
    #allocation8 [shape = 'u8[262144]{0}', space=vmem, size = 0x40000, scoped, tag = 'input window, operand 3, single buffered']
    #allocation9 [shape = 's32[1]{0}', space=sflag, size = 0x4, scoped, tag = 'scoped memory for tpu_custom_call.1']
    #allocation10 [shape = 'u8[65536]{0}', space=vmem, size = 0x10000, scoped, tag = 'input window, operand 4, single buffered']
    #allocation11 [shape = 'u8[32768]{0}', space=vmem, size = 0x8000, scoped, tag = 'input window, operand 5, single buffered']
    #allocation12 [shape = 's32[1]{0}', space=sflag, size = 0x4, scoped, tag = 'scoped memory for tpu_custom_call.1']
    #allocation13 [shape = 'u8[32768]{0}', space=vmem, size = 0x8000, scoped, tag = 'input window, operand 6, single buffered']
    #allocation14 [shape = 'u8[4096]{0}', space=vmem, size = 0x1000, scoped, tag = 'output window, operand 0, single buffered']
    %12 = vsyncpa [#allocation3], 0
    %13 = vsyncpa [#allocation6], 0
    %14 = vsyncpa [#allocation9], 0
    %15 = vsyncpa [#allocation12], 0
    %16 = vsyncpa [#allocation4], 0
    // Predicated region
    $region2: #{tpu_custom_call.1} parent=1 // pred_check
      _
    $region3: #{tpu_custom_call.1} parent=1 // pred_check_branch
      %18 = sbr.rel (0) target = $region5
    $region4: #{tpu_custom_call.1} parent=1 // pred_region
      %s20 = ssub.s32 512, 512
      %21 = vsyncadd [#allocation3], %s20
      %s23 = sshll.u32 [#allocation2], 4
      %s24 = int_to_ptr.vmem [resolvable:$true] %s23
      %26 = dma.hbm_to_vmem [thread:$0]  %s0, 512, %s24, [#allocation3]
    $region5: #{tpu_custom_call.1} parent=1 // pred_fallthru
      _
    // Predicated region
    $region6: #{tpu_custom_call.1} parent=1 // pred_check
      _
    $region7: #{tpu_custom_call.1} parent=1 // pred_check_branch
      %28 = sbr.rel (0) target = $region9
    $region8: #{tpu_custom_call.1} parent=1 // pred_region
      %s30 = ssub.s32 128, 128
      %31 = vsyncadd [#allocation6], %s30
      %s33 = sshll.u32 [#allocation5], 4
      %s34 = int_to_ptr.vmem [resolvable:$true] %s33
      %36 = dma.hbm_to_vmem [thread:$0]  %s1, 128, %s34, [#allocation6]
    $region9: #{tpu_custom_call.1} parent=1 // pred_fallthru
      _
    // Predicated region
    $region10: #{tpu_custom_call.1} parent=1 // pred_check
      _
    $region11: #{tpu_custom_call.1} parent=1 // pred_check_branch
      %38 = sbr.rel (0) target = $region13
    $region12: #{tpu_custom_call.1} parent=1 // pred_region
      %s40 = ssub.s32 4096, 4096
      %41 = vsyncadd [#allocation6], %s40
      %s42 = sshll.u32 [#allocation7], 4
      %s43 = int_to_ptr.vmem [resolvable:$true] %s42
      %48 = dma.hbm_to_vmem [thread:$0]  %s2, 4096, %s43, [#allocation6], 256, 256, 16
    $region13: #{tpu_custom_call.1} parent=1 // pred_fallthru
      _
    // Predicated region
    $region14: #{tpu_custom_call.1} parent=1 // pred_check
      _
    $region15: #{tpu_custom_call.1} parent=1 // pred_check_branch
      %50 = sbr.rel (0) target = $region17
    $region16: #{tpu_custom_call.1} parent=1 // pred_region
      %s52 = ssub.s32 8192, 8192
      %53 = vsyncadd [#allocation9], %s52
      %s54 = sshll.u32 [#allocation8], 4
      %s55 = int_to_ptr.vmem [resolvable:$true] %s54
      %60 = dma.hbm_to_vmem [thread:$0]  %s3, 8192, %s55, [#allocation9], 128, 128, 8
    $region17: #{tpu_custom_call.1} parent=1 // pred_fallthru
      _
    // Predicated region
    $region18: #{tpu_custom_call.1} parent=1 // pred_check
      _
    $region19: #{tpu_custom_call.1} parent=1 // pred_check_branch
      %62 = sbr.rel (0) target = $region21
    $region20: #{tpu_custom_call.1} parent=1 // pred_region
      %s64 = ssub.s32 2048, 2048
      %65 = vsyncadd [#allocation9], %s64
      %s66 = sshll.u32 [#allocation10], 4
      %s67 = int_to_ptr.vmem [resolvable:$true] %s66
      %72 = dma.hbm_to_vmem [thread:$0]  %s4, 2048, %s67, [#allocation9], 128, 128, 8
    $region21: #{tpu_custom_call.1} parent=1 // pred_fallthru
      _
    // Predicated region
    $region22: #{tpu_custom_call.1} parent=1 // pred_check
      _
    $region23: #{tpu_custom_call.1} parent=1 // pred_check_branch
      %74 = sbr.rel (0) target = $region25
    $region24: #{tpu_custom_call.1} parent=1 // pred_region
      %s76 = ssub.s32 1024, 1024
      %77 = vsyncadd [#allocation12], %s76
      %s78 = sshll.u32 [#allocation11], 4
      %s79 = int_to_ptr.vmem [resolvable:$true] %s78
      %84 = dma.hbm_to_vmem [thread:$0]  %s5, 1024, %s79, [#allocation12], 64, 64, 4
    $region25: #{tpu_custom_call.1} parent=1 // pred_fallthru
      _
    // Predicated region
    $region26: #{tpu_custom_call.1} parent=1 // pred_check
      _
    $region27: #{tpu_custom_call.1} parent=1 // pred_check_branch
      %86 = sbr.rel (0) target = $region29
    $region28: #{tpu_custom_call.1} parent=1 // pred_region
      %s88 = ssub.s32 1024, 1024
      %89 = vsyncadd [#allocation12], %s88
      %s90 = sshll.u32 [#allocation13], 4
      %s91 = int_to_ptr.vmem [resolvable:$true] %s90
      %96 = dma.hbm_to_vmem [thread:$0]  %s6, 1024, %s91, [#allocation12], 512, 512, 32
    $region29: #{tpu_custom_call.1} parent=1 // pred_fallthru
      _
    // Predicated region
    $region30: #{tpu_custom_call.1} parent=1 // pred_check
      _
    $region31: #{tpu_custom_call.1} parent=1 // pred_check_branch
      %98 = sbr.rel (0) target = $region33
    $region32: #{tpu_custom_call.1} parent=1 // pred_region
      %99 = dma.done [#allocation3], 512
    $region33: #{tpu_custom_call.1} parent=1 // pred_fallthru
      _
    // Predicated region
    $region34: #{tpu_custom_call.1} parent=1 // pred_check
      _
    $region35: #{tpu_custom_call.1} parent=1 // pred_check_branch
      %101 = sbr.rel (0) target = $region37
    $region36: #{tpu_custom_call.1} parent=1 // pred_region
      %102 = dma.done [#allocation6], 128
    $region37: #{tpu_custom_call.1} parent=1 // pred_fallthru
      _
    // Predicated region
    $region38: #{tpu_custom_call.1} parent=1 // pred_check
      _
    $region39: #{tpu_custom_call.1} parent=1 // pred_check_branch
      %104 = sbr.rel (0) target = $region41
    $region40: #{tpu_custom_call.1} parent=1 // pred_region
      %105 = dma.done [#allocation6], 4096
    $region41: #{tpu_custom_call.1} parent=1 // pred_fallthru
      _
    // Predicated region
    $region42: #{tpu_custom_call.1} parent=1 // pred_check
      _
    $region43: #{tpu_custom_call.1} parent=1 // pred_check_branch
      %107 = sbr.rel (0) target = $region45
    $region44: #{tpu_custom_call.1} parent=1 // pred_region
      %108 = dma.done [#allocation9], 8192
    $region45: #{tpu_custom_call.1} parent=1 // pred_fallthru
      _
    // Predicated region
    $region46: #{tpu_custom_call.1} parent=1 // pred_check
      _
    $region47: #{tpu_custom_call.1} parent=1 // pred_check_branch
      %110 = sbr.rel (0) target = $region49
    $region48: #{tpu_custom_call.1} parent=1 // pred_region
      %111 = dma.done [#allocation9], 2048
    $region49: #{tpu_custom_call.1} parent=1 // pred_fallthru
      _
    // Predicated region
    $region50: #{tpu_custom_call.1} parent=1 // pred_check
      _
    $region51: #{tpu_custom_call.1} parent=1 // pred_check_branch
      %113 = sbr.rel (0) target = $region53
    $region52: #{tpu_custom_call.1} parent=1 // pred_region
      %114 = dma.done [#allocation12], 1024
    $region53: #{tpu_custom_call.1} parent=1 // pred_fallthru
      _
    // Predicated region
    $region54: #{tpu_custom_call.1} parent=1 // pred_check
      _
    $region55: #{tpu_custom_call.1} parent=1 // pred_check_branch
      %116 = sbr.rel (0) target = $region57
    $region56: #{tpu_custom_call.1} parent=1 // pred_region
      %117 = dma.done [#allocation12], 1024
    $region57: #{tpu_custom_call.1} parent=1 // pred_fallthru
      _
    %v119 = vlaneseq
    %v120 = vshrl.u32 %v119, 7
    %vm121 = vcmp.lt.s32.totalorder %v120, 2
    %v122 = vsel %vm121, 1, 0
    %v123 = vcvt.s32.f32 %v122
    %v124 = vld [vmem:[#allocation13] ss:$8 sm:$0xf]
    %s125 = scalar_lea.vmem [#allocation13], 1
    %v126 = vld [vmem:[%s125] ss:$8 sm:$0xf]
    %v127 = vld [vmem:[#allocation13 + $0x2] ss:$0 sm:$0xff]
    %v128 = vld [vmem:[#allocation13 + $0x3] ss:$0 sm:$0xff]
    %v129 = vld [vmem:[#allocation13 + $0x4] ss:$0 sm:$0xff]
    %v130 = vld [vmem:[#allocation13 + $0x5] ss:$0 sm:$0xff]
    %v131 = vld [vmem:[#allocation13 + $0x6] ss:$0 sm:$0xff]
    %v132 = vld [vmem:[#allocation13 + $0x7] ss:$0 sm:$0xff]
    %v133 = vld [vmem:[#allocation13 + $0x20] ss:$0 sm:$0xff]
    %v134 = vld [vmem:[#allocation13 + $0x21] ss:$0 sm:$0xff]
    %v135 = vld [vmem:[#allocation2] sm:$0xff]
    %v136 = vld [vmem:[#allocation2 + $0x8] sm:$0xff]
    %v137 = vld [vmem:[#allocation2 + $0x10] sm:$0xff]
    %v138 = vld [vmem:[#allocation2 + $0x18] sm:$0xff]
    %v139 = vld [vmem:[#allocation5] sm:$0xff]
    %v140 = vpack.c.bf16 %v139, %v139
    %v141 = vld [vmem:[#allocation7] sm:$0xff]
    %v142 = vld [vmem:[#allocation7 + $0x8] sm:$0xff]
    %v143 = vld [vmem:[#allocation7 + $0x10] sm:$0xff]
    %v144 = vld [vmem:[#allocation7 + $0x18] sm:$0xff]
    %v145 = vld [vmem:[#allocation7 + $0x20] sm:$0xff]
    %v146 = vld [vmem:[#allocation7 + $0x28] sm:$0xff]
    %v147 = vld [vmem:[#allocation7 + $0x30] sm:$0xff]
    %v148 = vld [vmem:[#allocation7 + $0x38] sm:$0xff]
    %v149 = vld [vmem:[#allocation7 + $0x40] sm:$0xff]
    %v150 = vld [vmem:[#allocation7 + $0x48] sm:$0xff]
    %v151 = vld [vmem:[#allocation7 + $0x50] sm:$0xff]
    %v152 = vld [vmem:[#allocation7 + $0x58] sm:$0xff]
    %v153 = vld [vmem:[#allocation7 + $0x60] sm:$0xff]
    %v154 = vld [vmem:[#allocation7 + $0x68] sm:$0xff]
    %v155 = vld [vmem:[#allocation7 + $0x70] sm:$0xff]
    %v156 = vld [vmem:[#allocation7 + $0x78] sm:$0xff]
    %v157 = vld [vmem:[#allocation7 + $0x80] sm:$0xff]
    %v158 = vld [vmem:[#allocation7 + $0x88] sm:$0xff]
    %v159 = vld [vmem:[#allocation7 + $0x90] sm:$0xff]
    %v160 = vld [vmem:[#allocation7 + $0x98] sm:$0xff]
    %v161 = vld [vmem:[#allocation7 + $0xa0] sm:$0xff]
    %v162 = vld [vmem:[#allocation7 + $0xa8] sm:$0xff]
    %v163 = vld [vmem:[#allocation7 + $0xb0] sm:$0xff]
    %v164 = vld [vmem:[#allocation7 + $0xb8] sm:$0xff]
    %v165 = vld [vmem:[#allocation7 + $0xc0] sm:$0xff]
    %v166 = vld [vmem:[#allocation7 + $0xc8] sm:$0xff]
    %v167 = vld [vmem:[#allocation7 + $0xd0] sm:$0xff]
    %v168 = vld [vmem:[#allocation7 + $0xd8] sm:$0xff]
    %v169 = vld [vmem:[#allocation7 + $0xe0] sm:$0xff]
    %v170 = vld [vmem:[#allocation7 + $0xe8] sm:$0xff]
    %v171 = vld [vmem:[#allocation7 + $0xf0] sm:$0xff]
    %v172 = vld [vmem:[#allocation7 + $0xf8] sm:$0xff]
    %v205 = vunpack.c.l.b16 %v141
    %v206 = vunpack.c.h.b16 %v141
    %v207 = vunpack.c.l.b16 %v142
    %v208 = vunpack.c.h.b16 %v142
    %v209 = vunpack.c.l.b16 %v143
    %v210 = vunpack.c.h.b16 %v143
    %v211 = vunpack.c.l.b16 %v144
    %v212 = vunpack.c.h.b16 %v144
    %v213 = vunpack.c.l.b16 %v145
    %v214 = vunpack.c.h.b16 %v145
    %v215 = vunpack.c.l.b16 %v146
    %v216 = vunpack.c.h.b16 %v146
    %v217 = vunpack.c.l.b16 %v147
    %v218 = vunpack.c.h.b16 %v147
    %v219 = vunpack.c.l.b16 %v148
    %v220 = vunpack.c.h.b16 %v148
    %v221 = vunpack.c.l.b16 %v149
    %v222 = vunpack.c.h.b16 %v149
    %v223 = vunpack.c.l.b16 %v150
    %v224 = vunpack.c.h.b16 %v150
    %v225 = vunpack.c.l.b16 %v151
    %v226 = vunpack.c.h.b16 %v151
    %v227 = vunpack.c.l.b16 %v152
    %v228 = vunpack.c.h.b16 %v152
    %v229 = vunpack.c.l.b16 %v153
    %v230 = vunpack.c.h.b16 %v153
    %v231 = vunpack.c.l.b16 %v154
    %v232 = vunpack.c.h.b16 %v154
    %v233 = vunpack.c.l.b16 %v155
    %v234 = vunpack.c.h.b16 %v155
    %v235 = vunpack.c.l.b16 %v156
    %v236 = vunpack.c.h.b16 %v156
    %v237 = vunpack.c.l.b16 %v157
    %v238 = vunpack.c.h.b16 %v157
    %v239 = vunpack.c.l.b16 %v158
    %v240 = vunpack.c.h.b16 %v158
    %v241 = vunpack.c.l.b16 %v159
    %v242 = vunpack.c.h.b16 %v159
    %v243 = vunpack.c.l.b16 %v160
    %v244 = vunpack.c.h.b16 %v160
    %v245 = vunpack.c.l.b16 %v161
    %v246 = vunpack.c.h.b16 %v161
    %v247 = vunpack.c.l.b16 %v162
    %v248 = vunpack.c.h.b16 %v162
    %v249 = vunpack.c.l.b16 %v163
    %v250 = vunpack.c.h.b16 %v163
    %v251 = vunpack.c.l.b16 %v164
    %v252 = vunpack.c.h.b16 %v164
    %v253 = vunpack.c.l.b16 %v165
    %v254 = vunpack.c.h.b16 %v165
    %v255 = vunpack.c.l.b16 %v166
    %v256 = vunpack.c.h.b16 %v166
    %v257 = vunpack.c.l.b16 %v167
    %v258 = vunpack.c.h.b16 %v167
    %v259 = vunpack.c.l.b16 %v168
    %v260 = vunpack.c.h.b16 %v168
    %v261 = vunpack.c.l.b16 %v169
    %v262 = vunpack.c.h.b16 %v169
    %v263 = vunpack.c.l.b16 %v170
    %v264 = vunpack.c.h.b16 %v170
    %v265 = vunpack.c.l.b16 %v171
    %v266 = vunpack.c.h.b16 %v171
    %v267 = vunpack.c.l.b16 %v172
    %v268 = vunpack.c.h.b16 %v172
    %v269 = vpack.c.b16 %v209, %v205
    %v270 = vpack.c.b16 %v210, %v206
    %v271 = vpack.c.b16 %v211, %v207
    %v272 = vpack.c.b16 %v212, %v208
    %v273 = vpack.c.b16 %v217, %v213
    %v274 = vpack.c.b16 %v218, %v214
    %v275 = vpack.c.b16 %v219, %v215
    %v276 = vpack.c.b16 %v220, %v216
    %v277 = vpack.c.b16 %v225, %v221
    %v278 = vpack.c.b16 %v226, %v222
    %v279 = vpack.c.b16 %v227, %v223
    %v280 = vpack.c.b16 %v228, %v224
    %v281 = vpack.c.b16 %v233, %v229
    %v282 = vpack.c.b16 %v234, %v230
    %v283 = vpack.c.b16 %v235, %v231
    %v284 = vpack.c.b16 %v236, %v232
    %v285 = vpack.c.b16 %v241, %v237
    %v286 = vpack.c.b16 %v242, %v238
    %v287 = vpack.c.b16 %v243, %v239
    %v288 = vpack.c.b16 %v244, %v240
    %v289 = vpack.c.b16 %v249, %v245
    %v290 = vpack.c.b16 %v250, %v246
    %v291 = vpack.c.b16 %v251, %v247
    %v292 = vpack.c.b16 %v252, %v248
    %v293 = vpack.c.b16 %v257, %v253
    %v294 = vpack.c.b16 %v258, %v254
    %v295 = vpack.c.b16 %v259, %v255
    %v296 = vpack.c.b16 %v260, %v256
    %v297 = vpack.c.b16 %v265, %v261
    %v298 = vpack.c.b16 %v266, %v262
    %v299 = vpack.c.b16 %v267, %v263
    %v300 = vpack.c.b16 %v268, %v264
    %333 = vmatprep.subr.bf16.mxu0 %v270
    %334 = vmatpush1.bf16.msra.mxu0 %v269
    %335 = vmatprep.subr.bf16.mxu0 %v274
    %336 = vmatpush1.bf16.msra.mxu0 %v273
    %337 = vmatprep.subr.bf16.mxu0 %v278
    %338 = vmatpush1.bf16.msra.mxu0 %v277
    %339 = vmatprep.subr.bf16.mxu0 %v282
    %340 = vmatpush1.bf16.msra.mxu0 %v281
    %341 = vmatprep.subr.bf16.mxu0 %v286
    %342 = vmatpush1.bf16.msra.mxu0 %v285
    %343 = vmatprep.subr.bf16.mxu0 %v290
    %344 = vmatpush1.bf16.msra.mxu0 %v289
    %345 = vmatprep.subr.bf16.mxu0 %v294
    %346 = vmatpush1.bf16.msra.mxu0 %v293
    %347 = vmatprep.subr.bf16.mxu0 %v298
    %348 = vmatpush1.bf16.msra.mxu0 %v297
    %349 = vmatprep.subr.bf16.mxu0 0
    %350 = vmatpush1.bf16.msra.mxu0 0
    %351 = vmatprep.subr.bf16.mxu0 0
    %352 = vmatpush1.bf16.msra.mxu0 0
    %353 = vmatprep.subr.bf16.mxu0 0
    %354 = vmatpush1.bf16.msra.mxu0 0
    %355 = vmatprep.subr.bf16.mxu0 0
    %356 = vmatpush1.bf16.msra.mxu0 0
    %357 = vmatprep.subr.bf16.mxu0 0
    %358 = vmatpush1.bf16.msra.mxu0 0
    %359 = vmatprep.subr.bf16.mxu0 0
    %360 = vmatpush1.bf16.msra.mxu0 0
    %361 = vmatprep.subr.bf16.mxu0 0
    %362 = vmatpush1.bf16.msra.mxu0 0
    %363 = vmatprep.subr.bf16.mxu0 0
    %364 = vmatpush1.bf16.msra.mxu0 0
    %365 = vmatprep.mubr.bf16.mxu0 0
    %366 = vmatmul.mubr.bf16.gmra.mrb[0].mxu0 %v140
    %v367 = vpop.f32.mrb[0].mxu0
    %v368 = vadd.f32 0.0, %v367
    %v369 = vpop.f32.mrb[0].mxu0
    %v370 = vadd.f32 0.0, %v369
    %v371 = vpop.f32.mrb[0].mxu0
    %v372 = vpop.f32.mrb[0].mxu0
    %373 = vdwg.mxu0
    %374 = vmatprep.subr.bf16.mxu0 %v272
    %375 = vmatpush1.bf16.msra.mxu0 %v271
    %376 = vmatprep.subr.bf16.mxu0 %v276
    %377 = vmatpush1.bf16.msra.mxu0 %v275
    %378 = vmatprep.subr.bf16.mxu0 %v280
    %379 = vmatpush1.bf16.msra.mxu0 %v279
    %380 = vmatprep.subr.bf16.mxu0 %v284
    %381 = vmatpush1.bf16.msra.mxu0 %v283
    %382 = vmatprep.subr.bf16.mxu0 %v288
    %383 = vmatpush1.bf16.msra.mxu0 %v287
    %384 = vmatprep.subr.bf16.mxu0 %v292
    %385 = vmatpush1.bf16.msra.mxu0 %v291
    %386 = vmatprep.subr.bf16.mxu0 %v296
    %387 = vmatpush1.bf16.msra.mxu0 %v295
    %388 = vmatprep.subr.bf16.mxu0 %v300
    %389 = vmatpush1.bf16.msra.mxu0 %v299
    %390 = vmatprep.subr.bf16.mxu0 0
    %391 = vmatpush1.bf16.msra.mxu0 0
    %392 = vmatprep.subr.bf16.mxu0 0
    %393 = vmatpush1.bf16.msra.mxu0 0
    %394 = vmatprep.subr.bf16.mxu0 0
    %395 = vmatpush1.bf16.msra.mxu0 0
    %396 = vmatprep.subr.bf16.mxu0 0
    %397 = vmatpush1.bf16.msra.mxu0 0
    %398 = vmatprep.subr.bf16.mxu0 0
    %399 = vmatpush1.bf16.msra.mxu0 0
    %400 = vmatprep.subr.bf16.mxu0 0
    %401 = vmatpush1.bf16.msra.mxu0 0
    %402 = vmatprep.subr.bf16.mxu0 0
    %403 = vmatpush1.bf16.msra.mxu0 0
    %404 = vmatprep.subr.bf16.mxu0 0
    %405 = vmatpush1.bf16.msra.mxu0 0
    %406 = vmatprep.mubr.bf16.mxu0 0
    %407 = vmatmul.mubr.bf16.gmra.mrb[0].mxu0 %v140
    %v408 = vpop.f32.mrb[0].mxu0
    %v409 = vadd.f32 0.0, %v408
    %v410 = vpop.f32.mrb[0].mxu0
    %v411 = vadd.f32 0.0, %v410
    %v412 = vpop.f32.mrb[0].mxu0
    %v413 = vpop.f32.mrb[0].mxu0
    %414 = vdwg.mxu0
    %v415 = vrot.slane %v368, 4
    %v416 = vadd.f32 %v368, %v415
    %v417 = vrot.slane %v416, 2
    %v418 = vadd.f32 %v416, %v417
    %v419 = vrot.slane %v418, 1
    %v420 = vadd.f32 %v418, %v419
    %v421 = vrot.slane %v370, 4
    %v422 = vadd.f32 %v370, %v421
    %v423 = vrot.slane %v422, 2
    %v424 = vadd.f32 %v422, %v423
    %v425 = vrot.slane %v424, 1
    %v426 = vadd.f32 %v424, %v425
    %v427 = vrot.slane %v409, 4
    %v428 = vadd.f32 %v409, %v427
    %v429 = vrot.slane %v428, 2
    %v430 = vadd.f32 %v428, %v429
    %v431 = vrot.slane %v430, 1
    %v432 = vadd.f32 %v430, %v431
    %v433 = vrot.slane %v411, 4
    %v434 = vadd.f32 %v411, %v433
    %v435 = vrot.slane %v434, 2
    %v436 = vadd.f32 %v434, %v435
    %v437 = vrot.slane %v436, 1
    %v438 = vadd.f32 %v436, %v437
    %v439 = vmul.f32 %v420, 0.5
    %v440 = vmul.f32 %v426, 0.5
    %v441 = vmul.f32 %v432, 0.5
    %v442 = vmul.f32 %v438, 0.5
    %v443 = vsub.f32 %v368, %v439
    %v444 = vsub.f32 %v370, %v440
    %v445 = vsub.f32 %v409, %v441
    %v446 = vsub.f32 %v411, %v442
    %v447 = vmul.f32 %v443, %v443
    %v448 = vmul.f32 %v444, %v444
    %v449 = vmul.f32 %v445, %v445
    %v450 = vmul.f32 %v446, %v446
    %v451 = vrot.slane %v447, 4
    %v452 = vadd.f32 %v447, %v451
    %v453 = vrot.slane %v452, 2
    %v454 = vadd.f32 %v452, %v453
    %v455 = vrot.slane %v454, 1
    %v456 = vadd.f32 %v454, %v455
    %v457 = vrot.slane %v448, 4
    %v458 = vadd.f32 %v448, %v457
    %v459 = vrot.slane %v458, 2
    %v460 = vadd.f32 %v458, %v459
    %v461 = vrot.slane %v460, 1
    %v462 = vadd.f32 %v460, %v461
    %v463 = vrot.slane %v449, 4
    %v464 = vadd.f32 %v449, %v463
    %v465 = vrot.slane %v464, 2
    %v466 = vadd.f32 %v464, %v465
    %v467 = vrot.slane %v466, 1
    %v468 = vadd.f32 %v466, %v467
    %v469 = vrot.slane %v450, 4
    %v470 = vadd.f32 %v450, %v469
    %v471 = vrot.slane %v470, 2
    %v472 = vadd.f32 %v470, %v471
    %v473 = vrot.slane %v472, 1
    %v474 = vadd.f32 %v472, %v473
    %v475 = vmul.f32 %v456, 0.5
    %v476 = vmul.f32 %v462, 0.5
    %v477 = vmul.f32 %v468, 0.5
    %v478 = vmul.f32 %v474, 0.5
    %v479 = vmul.f32 %v439, %v439
    %v480 = vmul.f32 %v440, %v440
    %v481 = vmul.f32 %v441, %v441
    %v482 = vmul.f32 %v442, %v442
    %v483 = vmul.f32 %v479, 3.0
    %v484 = vmul.f32 %v480, 3.0
    %v485 = vmul.f32 %v481, 3.0
    %v486 = vmul.f32 %v482, 3.0
    %v487 = vsub.f32 %v475, %v483
    %v488 = vsub.f32 %v476, %v484
    %v489 = vsub.f32 %v477, %v485
    %v490 = vsub.f32 %v478, %v486
    %v491 = vmax.f32 %v487, 0.0
    %v492 = vmax.f32 %v488, 0.0
    %v493 = vmax.f32 %v489, 0.0
    %v494 = vmax.f32 %v490, 0.0
    %v495 = vadd.f32 %v491, 1e-05
    %v496 = vadd.f32 %v492, 1e-05
    %v497 = vadd.f32 %v493, 1e-05
    %v498 = vadd.f32 %v494, 1e-05
    %v499 = vrsqrt.pop %v495
    %v500 = vrsqrt.pop %v496
    %v501 = vrsqrt.pop %v497
    %v502 = vrsqrt.pop %v498
    %v503 = vmul.f32 %v443, %v499
    %v504 = vmul.f32 %v444, %v500
    %v505 = vmul.f32 %v445, %v501
    %v506 = vmul.f32 %v446, %v502
    %v508 = vlaneseq
    %v509 = vshrl.u32 %v508, 7
    %v510 = vsub.s32 0, %v509
    %v511 = vrot.slane %v124, %v510
    %v512 = vlaneseq
    %v513 = vshrl.u32 %v512, 7
    %v514 = vsub.s32 1, %v513
    %v515 = vrot.slane %v124, %v514
    %v516 = vlaneseq
    %v517 = vshrl.u32 %v516, 7
    %v518 = vsub.s32 2, %v517
    %v519 = vrot.slane %v124, %v518
    %v520 = vlaneseq
    %v521 = vshrl.u32 %v520, 7
    %v522 = vsub.s32 3, %v521
    %v523 = vrot.slane %v124, %v522
    %v528 = vmul.f32 %v503, %v511
    %v529 = vmul.f32 %v504, %v515
    %v530 = vmul.f32 %v505, %v519
    %v531 = vmul.f32 %v506, %v523
    %v533 = vlaneseq
    %v534 = vshrl.u32 %v533, 7
    %v535 = vsub.s32 0, %v534
    %v536 = vrot.slane %v126, %v535
    %v537 = vlaneseq
    %v538 = vshrl.u32 %v537, 7
    %v539 = vsub.s32 1, %v538
    %v540 = vrot.slane %v126, %v539
    %v541 = vlaneseq
    %v542 = vshrl.u32 %v541, 7
    %v543 = vsub.s32 2, %v542
    %v544 = vrot.slane %v126, %v543
    %v545 = vlaneseq
    %v546 = vshrl.u32 %v545, 7
    %v547 = vsub.s32 3, %v546
    %v548 = vrot.slane %v126, %v547
    %v553 = vadd.f32 %v528, %v536
    %v554 = vadd.f32 %v529, %v540
    %v555 = vadd.f32 %v530, %v544
    %v556 = vadd.f32 %v531, %v548
    %v557 = vmul.f32 %v553, 0.5
    %v558 = vmul.f32 %v554, 0.5
    %v559 = vmul.f32 %v555, 0.5
    %v560 = vmul.f32 %v556, 0.5
    %v561 = vtanh.pop %v557
    %v562 = vtanh.pop %v558
    %v563 = vtanh.pop %v559
    %v564 = vtanh.pop %v560
    %v565 = vmul.f32 %v561, 0.5
    %v566 = vmul.f32 %v562, 0.5
    %v567 = vmul.f32 %v563, 0.5
    %v568 = vmul.f32 %v564, 0.5
    %v569 = vadd.f32 %v565, 0.5
    %v570 = vadd.f32 %v566, 0.5
    %v571 = vadd.f32 %v567, 0.5
    %v572 = vadd.f32 %v568, 0.5
    %v573 = vmul.f32 %v135, %v569
    %v574 = vmul.f32 %v136, %v570
    %v575 = vmul.f32 %v137, %v571
    %v576 = vmul.f32 %v138, %v572
    %v577 = vpack.c.bf16 %v569, %v573
    %v578 = vpack.c.bf16 %v570, %v574
    %v579 = vpack.c.bf16 %v571, %v575
    %v580 = vpack.c.bf16 %v572, %v576
    %v581 = vld [vmem:[#allocation8] sm:$0xff]
    %v582 = vld [vmem:[#allocation8 + $0x8] sm:$0xff]
    %v583 = vld [vmem:[#allocation8 + $0x10] sm:$0xff]
    %v584 = vld [vmem:[#allocation8 + $0x18] sm:$0xff]
    %v585 = vld [vmem:[#allocation8 + $0x20] sm:$0xff]
    %v586 = vld [vmem:[#allocation8 + $0x28] sm:$0xff]
    %v587 = vld [vmem:[#allocation8 + $0x30] sm:$0xff]
    %v588 = vld [vmem:[#allocation8 + $0x38] sm:$0xff]
    %v589 = vld [vmem:[#allocation8 + $0x40] sm:$0xff]
    %v590 = vld [vmem:[#allocation8 + $0x48] sm:$0xff]
    %v591 = vld [vmem:[#allocation8 + $0x50] sm:$0xff]
    %v592 = vld [vmem:[#allocation8 + $0x58] sm:$0xff]
    %v593 = vld [vmem:[#allocation8 + $0x60] sm:$0xff]
    %v594 = vld [vmem:[#allocation8 + $0x68] sm:$0xff]
    %v595 = vld [vmem:[#allocation8 + $0x70] sm:$0xff]
    %v596 = vld [vmem:[#allocation8 + $0x78] sm:$0xff]
    %v597 = vld [vmem:[#allocation8 + $0x80] sm:$0xff]
    %v598 = vld [vmem:[#allocation8 + $0x88] sm:$0xff]
    %v599 = vld [vmem:[#allocation8 + $0x90] sm:$0xff]
    %v600 = vld [vmem:[#allocation8 + $0x98] sm:$0xff]
    %v601 = vld [vmem:[#allocation8 + $0xa0] sm:$0xff]
    %v602 = vld [vmem:[#allocation8 + $0xa8] sm:$0xff]
    %v603 = vld [vmem:[#allocation8 + $0xb0] sm:$0xff]
    %v604 = vld [vmem:[#allocation8 + $0xb8] sm:$0xff]
    %v605 = vld [vmem:[#allocation8 + $0xc0] sm:$0xff]
    %v606 = vld [vmem:[#allocation8 + $0xc8] sm:$0xff]
    %v607 = vld [vmem:[#allocation8 + $0xd0] sm:$0xff]
    %v608 = vld [vmem:[#allocation8 + $0xd8] sm:$0xff]
    %v609 = vld [vmem:[#allocation8 + $0xe0] sm:$0xff]
    %v610 = vld [vmem:[#allocation8 + $0xe8] sm:$0xff]
    %v611 = vld [vmem:[#allocation8 + $0xf0] sm:$0xff]
    %v612 = vld [vmem:[#allocation8 + $0xf8] sm:$0xff]
    %v613 = vld [vmem:[#allocation8 + $0x100] sm:$0xff]
    %v614 = vld [vmem:[#allocation8 + $0x108] sm:$0xff]
    %v615 = vld [vmem:[#allocation8 + $0x110] sm:$0xff]
    %v616 = vld [vmem:[#allocation8 + $0x118] sm:$0xff]
    %v617 = vld [vmem:[#allocation8 + $0x120] sm:$0xff]
    %v618 = vld [vmem:[#allocation8 + $0x128] sm:$0xff]
    %v619 = vld [vmem:[#allocation8 + $0x130] sm:$0xff]
    %v620 = vld [vmem:[#allocation8 + $0x138] sm:$0xff]
    %v621 = vld [vmem:[#allocation8 + $0x140] sm:$0xff]
    %v622 = vld [vmem:[#allocation8 + $0x148] sm:$0xff]
    %v623 = vld [vmem:[#allocation8 + $0x150] sm:$0xff]
    %v624 = vld [vmem:[#allocation8 + $0x158] sm:$0xff]
    %v625 = vld [vmem:[#allocation8 + $0x160] sm:$0xff]
    %v626 = vld [vmem:[#allocation8 + $0x168] sm:$0xff]
    %v627 = vld [vmem:[#allocation8 + $0x170] sm:$0xff]
    %v628 = vld [vmem:[#allocation8 + $0x178] sm:$0xff]
    %v629 = vld [vmem:[#allocation8 + $0x180] sm:$0xff]
    %v630 = vld [vmem:[#allocation8 + $0x188] sm:$0xff]
    %v631 = vld [vmem:[#allocation8 + $0x190] sm:$0xff]
    %v632 = vld [vmem:[#allocation8 + $0x198] sm:$0xff]
    %v633 = vld [vmem:[#allocation8 + $0x1a0] sm:$0xff]
    %v634 = vld [vmem:[#allocation8 + $0x1a8] sm:$0xff]
    %v635 = vld [vmem:[#allocation8 + $0x1b0] sm:$0xff]
    %v636 = vld [vmem:[#allocation8 + $0x1b8] sm:$0xff]
    %v637 = vld [vmem:[#allocation8 + $0x1c0] sm:$0xff]
    %v638 = vld [vmem:[#allocation8 + $0x1c8] sm:$0xff]
    %v639 = vld [vmem:[#allocation8 + $0x1d0] sm:$0xff]
    %v640 = vld [vmem:[#allocation8 + $0x1d8] sm:$0xff]
    %v641 = vld [vmem:[#allocation8 + $0x1e0] sm:$0xff]
    %v642 = vld [vmem:[#allocation8 + $0x1e8] sm:$0xff]
    %v643 = vld [vmem:[#allocation8 + $0x1f0] sm:$0xff]
    %v644 = vld [vmem:[#allocation8 + $0x1f8] sm:$0xff]
    %v709 = vunpack.c.l.b16 %v581
    %v710 = vunpack.c.h.b16 %v581
    %v711 = vunpack.c.l.b16 %v582
    %v712 = vunpack.c.h.b16 %v582
    %v713 = vunpack.c.l.b16 %v583
    %v714 = vunpack.c.h.b16 %v583
    %v715 = vunpack.c.l.b16 %v584
    %v716 = vunpack.c.h.b16 %v584
    %v717 = vunpack.c.l.b16 %v585
    %v718 = vunpack.c.h.b16 %v585
    %v719 = vunpack.c.l.b16 %v586
    %v720 = vunpack.c.h.b16 %v586
    %v721 = vunpack.c.l.b16 %v587
    %v722 = vunpack.c.h.b16 %v587
    %v723 = vunpack.c.l.b16 %v588
    %v724 = vunpack.c.h.b16 %v588
    %v725 = vunpack.c.l.b16 %v589
    %v726 = vunpack.c.h.b16 %v589
    %v727 = vunpack.c.l.b16 %v590
    %v728 = vunpack.c.h.b16 %v590
    %v729 = vunpack.c.l.b16 %v591
    %v730 = vunpack.c.h.b16 %v591
    %v731 = vunpack.c.l.b16 %v592
    %v732 = vunpack.c.h.b16 %v592
    %v733 = vunpack.c.l.b16 %v593
    %v734 = vunpack.c.h.b16 %v593
    %v735 = vunpack.c.l.b16 %v594
    %v736 = vunpack.c.h.b16 %v594
    %v737 = vunpack.c.l.b16 %v595
    %v738 = vunpack.c.h.b16 %v595
    %v739 = vunpack.c.l.b16 %v596
    %v740 = vunpack.c.h.b16 %v596
    %v741 = vunpack.c.l.b16 %v597
    %v742 = vunpack.c.h.b16 %v597
    %v743 = vunpack.c.l.b16 %v598
    %v744 = vunpack.c.h.b16 %v598
    %v745 = vunpack.c.l.b16 %v599
    %v746 = vunpack.c.h.b16 %v599
    %v747 = vunpack.c.l.b16 %v600
    %v748 = vunpack.c.h.b16 %v600
    %v749 = vunpack.c.l.b16 %v601
    %v750 = vunpack.c.h.b16 %v601
    %v751 = vunpack.c.l.b16 %v602
    %v752 = vunpack.c.h.b16 %v602
    %v753 = vunpack.c.l.b16 %v603
    %v754 = vunpack.c.h.b16 %v603
    %v755 = vunpack.c.l.b16 %v604
    %v756 = vunpack.c.h.b16 %v604
    %v757 = vunpack.c.l.b16 %v605
    %v758 = vunpack.c.h.b16 %v605
    %v759 = vunpack.c.l.b16 %v606
    %v760 = vunpack.c.h.b16 %v606
    %v761 = vunpack.c.l.b16 %v607
    %v762 = vunpack.c.h.b16 %v607
    %v763 = vunpack.c.l.b16 %v608
    %v764 = vunpack.c.h.b16 %v608
    %v765 = vunpack.c.l.b16 %v609
    %v766 = vunpack.c.h.b16 %v609
    %v767 = vunpack.c.l.b16 %v610
    %v768 = vunpack.c.h.b16 %v610
    %v769 = vunpack.c.l.b16 %v611
    %v770 = vunpack.c.h.b16 %v611
    %v771 = vunpack.c.l.b16 %v612
    %v772 = vunpack.c.h.b16 %v612
    %v773 = vunpack.c.l.b16 %v613
    %v774 = vunpack.c.h.b16 %v613
    %v775 = vunpack.c.l.b16 %v614
    %v776 = vunpack.c.h.b16 %v614
    %v777 = vunpack.c.l.b16 %v615
    %v778 = vunpack.c.h.b16 %v615
    %v779 = vunpack.c.l.b16 %v616
    %v780 = vunpack.c.h.b16 %v616
    %v781 = vunpack.c.l.b16 %v617
    %v782 = vunpack.c.h.b16 %v617
    %v783 = vunpack.c.l.b16 %v618
    %v784 = vunpack.c.h.b16 %v618
    %v785 = vunpack.c.l.b16 %v619
    %v786 = vunpack.c.h.b16 %v619
    %v787 = vunpack.c.l.b16 %v620
    %v788 = vunpack.c.h.b16 %v620
    %v789 = vunpack.c.l.b16 %v621
    %v790 = vunpack.c.h.b16 %v621
    %v791 = vunpack.c.l.b16 %v622
    %v792 = vunpack.c.h.b16 %v622
    %v793 = vunpack.c.l.b16 %v623
    %v794 = vunpack.c.h.b16 %v623
    %v795 = vunpack.c.l.b16 %v624
    %v796 = vunpack.c.h.b16 %v624
    %v797 = vunpack.c.l.b16 %v625
    %v798 = vunpack.c.h.b16 %v625
    %v799 = vunpack.c.l.b16 %v626
    %v800 = vunpack.c.h.b16 %v626
    %v801 = vunpack.c.l.b16 %v627
    %v802 = vunpack.c.h.b16 %v627
    %v803 = vunpack.c.l.b16 %v628
    %v804 = vunpack.c.h.b16 %v628
    %v805 = vunpack.c.l.b16 %v629
    %v806 = vunpack.c.h.b16 %v629
    %v807 = vunpack.c.l.b16 %v630
    %v808 = vunpack.c.h.b16 %v630
    %v809 = vunpack.c.l.b16 %v631
    %v810 = vunpack.c.h.b16 %v631
    %v811 = vunpack.c.l.b16 %v632
    %v812 = vunpack.c.h.b16 %v632
    %v813 = vunpack.c.l.b16 %v633
    %v814 = vunpack.c.h.b16 %v633
    %v815 = vunpack.c.l.b16 %v634
    %v816 = vunpack.c.h.b16 %v634
    %v817 = vunpack.c.l.b16 %v635
    %v818 = vunpack.c.h.b16 %v635
    %v819 = vunpack.c.l.b16 %v636
    %v820 = vunpack.c.h.b16 %v636
    %v821 = vunpack.c.l.b16 %v637
    %v822 = vunpack.c.h.b16 %v637
    %v823 = vunpack.c.l.b16 %v638
    %v824 = vunpack.c.h.b16 %v638
    %v825 = vunpack.c.l.b16 %v639
    %v826 = vunpack.c.h.b16 %v639
    %v827 = vunpack.c.l.b16 %v640
    %v828 = vunpack.c.h.b16 %v640
    %v829 = vunpack.c.l.b16 %v641
    %v830 = vunpack.c.h.b16 %v641
    %v831 = vunpack.c.l.b16 %v642
    %v832 = vunpack.c.h.b16 %v642
    %v833 = vunpack.c.l.b16 %v643
    %v834 = vunpack.c.h.b16 %v643
    %v835 = vunpack.c.l.b16 %v644
    %v836 = vunpack.c.h.b16 %v644
    %v837 = vpack.c.b16 %v711, %v709
    %v838 = vpack.c.b16 %v712, %v710
    %v839 = vpack.c.b16 %v715, %v713
    %v840 = vpack.c.b16 %v716, %v714
    %v841 = vpack.c.b16 %v719, %v717
    %v842 = vpack.c.b16 %v720, %v718
    %v843 = vpack.c.b16 %v723, %v721
    %v844 = vpack.c.b16 %v724, %v722
    %v845 = vpack.c.b16 %v727, %v725
    %v846 = vpack.c.b16 %v728, %v726
    %v847 = vpack.c.b16 %v731, %v729
    %v848 = vpack.c.b16 %v732, %v730
    %v849 = vpack.c.b16 %v735, %v733
    %v850 = vpack.c.b16 %v736, %v734
    %v851 = vpack.c.b16 %v739, %v737
    %v852 = vpack.c.b16 %v740, %v738
    %v853 = vpack.c.b16 %v743, %v741
    %v854 = vpack.c.b16 %v744, %v742
    %v855 = vpack.c.b16 %v747, %v745
    %v856 = vpack.c.b16 %v748, %v746
    %v857 = vpack.c.b16 %v751, %v749
    %v858 = vpack.c.b16 %v752, %v750
    %v859 = vpack.c.b16 %v755, %v753
    %v860 = vpack.c.b16 %v756, %v754
    %v861 = vpack.c.b16 %v759, %v757
    %v862 = vpack.c.b16 %v760, %v758
    %v863 = vpack.c.b16 %v763, %v761
    %v864 = vpack.c.b16 %v764, %v762
    %v865 = vpack.c.b16 %v767, %v765
    %v866 = vpack.c.b16 %v768, %v766
    %v867 = vpack.c.b16 %v771, %v769
    %v868 = vpack.c.b16 %v772, %v770
    %v869 = vpack.c.b16 %v775, %v773
    %v870 = vpack.c.b16 %v776, %v774
    %v871 = vpack.c.b16 %v779, %v777
    %v872 = vpack.c.b16 %v780, %v778
    %v873 = vpack.c.b16 %v783, %v781
    %v874 = vpack.c.b16 %v784, %v782
    %v875 = vpack.c.b16 %v787, %v785
    %v876 = vpack.c.b16 %v788, %v786
    %v877 = vpack.c.b16 %v791, %v789
    %v878 = vpack.c.b16 %v792, %v790
    %v879 = vpack.c.b16 %v795, %v793
    %v880 = vpack.c.b16 %v796, %v794
    %v881 = vpack.c.b16 %v799, %v797
    %v882 = vpack.c.b16 %v800, %v798
    %v883 = vpack.c.b16 %v803, %v801
    %v884 = vpack.c.b16 %v804, %v802
    %v885 = vpack.c.b16 %v807, %v805
    %v886 = vpack.c.b16 %v808, %v806
    %v887 = vpack.c.b16 %v811, %v809
    %v888 = vpack.c.b16 %v812, %v810
    %v889 = vpack.c.b16 %v815, %v813
    %v890 = vpack.c.b16 %v816, %v814
    %v891 = vpack.c.b16 %v819, %v817
    %v892 = vpack.c.b16 %v820, %v818
    %v893 = vpack.c.b16 %v823, %v821
    %v894 = vpack.c.b16 %v824, %v822
    %v895 = vpack.c.b16 %v827, %v825
    %v896 = vpack.c.b16 %v828, %v826
    %v897 = vpack.c.b16 %v831, %v829
    %v898 = vpack.c.b16 %v832, %v830
    %v899 = vpack.c.b16 %v835, %v833
    %v900 = vpack.c.b16 %v836, %v834
    %965 = vmatprep.subr.bf16.mxu0 %v838
    %966 = vmatpush1.bf16.msra.mxu0 %v837
    %967 = vmatprep.subr.bf16.mxu0 %v840
    %968 = vmatpush1.bf16.msra.mxu0 %v839
    %969 = vmatprep.subr.bf16.mxu0 %v842
    %970 = vmatpush1.bf16.msra.mxu0 %v841
    %971 = vmatprep.subr.bf16.mxu0 %v844
    %972 = vmatpush1.bf16.msra.mxu0 %v843
    %973 = vmatprep.subr.bf16.mxu0 %v846
    %974 = vmatpush1.bf16.msra.mxu0 %v845
    %975 = vmatprep.subr.bf16.mxu0 %v848
    %976 = vmatpush1.bf16.msra.mxu0 %v847
    %977 = vmatprep.subr.bf16.mxu0 %v850
    %978 = vmatpush1.bf16.msra.mxu0 %v849
    %979 = vmatprep.subr.bf16.mxu0 %v852
    %980 = vmatpush1.bf16.msra.mxu0 %v851
    %981 = vmatprep.subr.bf16.mxu0 %v854
    %982 = vmatpush1.bf16.msra.mxu0 %v853
    %983 = vmatprep.subr.bf16.mxu0 %v856
    %984 = vmatpush1.bf16.msra.mxu0 %v855
    %985 = vmatprep.subr.bf16.mxu0 %v858
    %986 = vmatpush1.bf16.msra.mxu0 %v857
    %987 = vmatprep.subr.bf16.mxu0 %v860
    %988 = vmatpush1.bf16.msra.mxu0 %v859
    %989 = vmatprep.subr.bf16.mxu0 %v862
    %990 = vmatpush1.bf16.msra.mxu0 %v861
    %991 = vmatprep.subr.bf16.mxu0 %v864
    %992 = vmatpush1.bf16.msra.mxu0 %v863
    %993 = vmatprep.subr.bf16.mxu0 %v866
    %994 = vmatpush1.bf16.msra.mxu0 %v865
    %995 = vmatprep.subr.bf16.mxu0 %v868
    %996 = vmatpush1.bf16.msra.mxu0 %v867
    %997 = vmatprep.mubr.bf16.mxu0 %v578
    %998 = vmatmul.mubr.bf16.gmra.mrb[0].mxu0 %v577
    %v999 = vpop.f32.mrb[0].mxu0
    %v1000 = vadd.f32 0.0, %v999
    %v1001 = vpop.f32.mrb[0].mxu0
    %v1002 = vpop.f32.mrb[0].mxu0
    %v1003 = vpop.f32.mrb[0].mxu0
    %v1004 = vadd.f32 0.0, %v1003
    %1005 = vdwg.mxu0
    %1006 = vmatprep.subr.bf16.mxu0 %v870
    %1007 = vmatpush1.bf16.msra.mxu0 %v869
    %1008 = vmatprep.subr.bf16.mxu0 %v872
    %1009 = vmatpush1.bf16.msra.mxu0 %v871
    %1010 = vmatprep.subr.bf16.mxu0 %v874
    %1011 = vmatpush1.bf16.msra.mxu0 %v873
    %1012 = vmatprep.subr.bf16.mxu0 %v876
    %1013 = vmatpush1.bf16.msra.mxu0 %v875
    %1014 = vmatprep.subr.bf16.mxu0 %v878
    %1015 = vmatpush1.bf16.msra.mxu0 %v877
    %1016 = vmatprep.subr.bf16.mxu0 %v880
    %1017 = vmatpush1.bf16.msra.mxu0 %v879
    %1018 = vmatprep.subr.bf16.mxu0 %v882
    %1019 = vmatpush1.bf16.msra.mxu0 %v881
    %1020 = vmatprep.subr.bf16.mxu0 %v884
    %1021 = vmatpush1.bf16.msra.mxu0 %v883
    %1022 = vmatprep.subr.bf16.mxu0 %v886
    %1023 = vmatpush1.bf16.msra.mxu0 %v885
    %1024 = vmatprep.subr.bf16.mxu0 %v888
    %1025 = vmatpush1.bf16.msra.mxu0 %v887
    %1026 = vmatprep.subr.bf16.mxu0 %v890
    %1027 = vmatpush1.bf16.msra.mxu0 %v889
    %1028 = vmatprep.subr.bf16.mxu0 %v892
    %1029 = vmatpush1.bf16.msra.mxu0 %v891
    %1030 = vmatprep.subr.bf16.mxu0 %v894
    %1031 = vmatpush1.bf16.msra.mxu0 %v893
    %1032 = vmatprep.subr.bf16.mxu0 %v896
    %1033 = vmatpush1.bf16.msra.mxu0 %v895
    %1034 = vmatprep.subr.bf16.mxu0 %v898
    %1035 = vmatpush1.bf16.msra.mxu0 %v897
    %1036 = vmatprep.subr.bf16.mxu0 %v900
    %1037 = vmatpush1.bf16.msra.mxu0 %v899
    %1038 = vmatprep.mubr.bf16.mxu0 %v580
    %1039 = vmatmul.mubr.bf16.gmra.mrb[0].mxu0 %v579
    %v1040 = vpop.f32.mrb[0].mxu0
    %v1041 = vadd.f32 %v1000, %v1040
    %v1042 = vpop.f32.mrb[0].mxu0
    %v1043 = vpop.f32.mrb[0].mxu0
    %v1044 = vpop.f32.mrb[0].mxu0
    %v1045 = vadd.f32 %v1004, %v1044
    %1046 = vdwg.mxu0
    %v1047 = vrot.slane %v1041, 4
    %v1048 = vadd.f32 %v1041, %v1047
    %v1049 = vrot.slane %v1048, 2
    %v1050 = vadd.f32 %v1048, %v1049
    %v1051 = vrot.slane %v1050, 1
    %v1052 = vadd.f32 %v1050, %v1051
    %v1053 = vmul.f32 %v1052, 0.5
    %v1054 = vsub.f32 %v1041, %v1053
    %v1055 = vmul.f32 %v1054, %v1054
    %v1056 = vrot.slane %v1055, 4
    %v1057 = vadd.f32 %v1055, %v1056
    %v1058 = vrot.slane %v1057, 2
    %v1059 = vadd.f32 %v1057, %v1058
    %v1060 = vrot.slane %v1059, 1
    %v1061 = vadd.f32 %v1059, %v1060
    %v1062 = vmul.f32 %v1061, 0.5
    %v1063 = vmul.f32 %v1053, %v1053
    %v1064 = vmul.f32 %v1063, 3.0
    %v1065 = vsub.f32 %v1062, %v1064
    %v1066 = vmax.f32 %v1065, 0.0
    %v1067 = vadd.f32 %v1066, 1e-05
    %v1068 = vrsqrt.pop %v1067
    %v1069 = vmul.f32 %v1054, %v1068
    %v1070 = vmul.f32 %v1069, %v131
    %v1071 = vadd.f32 %v1070, %v132
    %v1072 = vmax.f32 %v1071, 0.0
    %v1073 = vmul.f32 %v1045, %v123
    %v1074 = vrot.slane %v1073, 4
    %v1075 = vadd.f32 %v1073, %v1074
    %v1076 = vrot.slane %v1075, 2
    %v1077 = vadd.f32 %v1075, %v1076
    %v1078 = vrot.slane %v1077, 1
    %v1079 = vadd.f32 %v1077, %v1078
    %v1080 = vmul.f32 %v1079, 0.5
    %v1081 = vsub.f32 %v1045, %v1080
    %v1082 = vsub.f32 %v1073, %v1080
    %v1083 = vmul.f32 %v1082, %v1082
    %v1084 = vrot.slane %v1083, 4
    %v1085 = vadd.f32 %v1083, %v1084
    %v1086 = vrot.slane %v1085, 2
    %v1087 = vadd.f32 %v1085, %v1086
    %v1088 = vrot.slane %v1087, 1
    %v1089 = vadd.f32 %v1087, %v1088
    %v1090 = vmul.f32 %v1089, 0.5
    %v1091 = vmul.f32 %v1080, %v1080
    %v1092 = vmul.f32 %v1091, 3.0
    %v1093 = vsub.f32 %v1090, %v1092
    %v1094 = vmax.f32 %v1093, 0.0
    %v1095 = vadd.f32 %v1094, 1e-05
    %v1096 = vrsqrt.pop %v1095
    %v1097 = vmul.f32 %v1081, %v1096
    %v1098 = vmul.f32 %v1097, %v127
    %v1099 = vadd.f32 %v1098, %v128
    %v1100 = vmul.f32 %v1099, 0.5
    %v1101 = vtanh.pop %v1100
    %v1102 = vmul.f32 %v1101, 0.5
    %v1103 = vadd.f32 %v1102, 0.5
    %v1104 = vmul.f32 %v1103, %v123
    %v1105 = vmul.f32 %v1072, %v1104
    %v1106 = vpack.c.bf16 %v1104, %v1105
    %v1107 = vld [vmem:[#allocation10] sm:$0xff]
    %v1108 = vld [vmem:[#allocation10 + $0x8] sm:$0xff]
    %v1109 = vld [vmem:[#allocation10 + $0x10] sm:$0xff]
    %v1110 = vld [vmem:[#allocation10 + $0x18] sm:$0xff]
    %v1111 = vld [vmem:[#allocation10 + $0x20] sm:$0xff]
    %v1112 = vld [vmem:[#allocation10 + $0x28] sm:$0xff]
    %v1113 = vld [vmem:[#allocation10 + $0x30] sm:$0xff]
    %v1114 = vld [vmem:[#allocation10 + $0x38] sm:$0xff]
    %v1115 = vld [vmem:[#allocation10 + $0x40] sm:$0xff]
    %v1116 = vld [vmem:[#allocation10 + $0x48] sm:$0xff]
    %v1117 = vld [vmem:[#allocation10 + $0x50] sm:$0xff]
    %v1118 = vld [vmem:[#allocation10 + $0x58] sm:$0xff]
    %v1119 = vld [vmem:[#allocation10 + $0x60] sm:$0xff]
    %v1120 = vld [vmem:[#allocation10 + $0x68] sm:$0xff]
    %v1121 = vld [vmem:[#allocation10 + $0x70] sm:$0xff]
    %v1122 = vld [vmem:[#allocation10 + $0x78] sm:$0xff]
    %v1139 = vunpack.c.l.b16 %v1107
    %v1140 = vunpack.c.h.b16 %v1107
    %v1141 = vunpack.c.l.b16 %v1108
    %v1142 = vunpack.c.h.b16 %v1108
    %v1143 = vunpack.c.l.b16 %v1109
    %v1144 = vunpack.c.h.b16 %v1109
    %v1145 = vunpack.c.l.b16 %v1110
    %v1146 = vunpack.c.h.b16 %v1110
    %v1147 = vunpack.c.l.b16 %v1111
    %v1148 = vunpack.c.h.b16 %v1111
    %v1149 = vunpack.c.l.b16 %v1112
    %v1150 = vunpack.c.h.b16 %v1112
    %v1151 = vunpack.c.l.b16 %v1113
    %v1152 = vunpack.c.h.b16 %v1113
    %v1153 = vunpack.c.l.b16 %v1114
    %v1154 = vunpack.c.h.b16 %v1114
    %v1155 = vunpack.c.l.b16 %v1115
    %v1156 = vunpack.c.h.b16 %v1115
    %v1157 = vunpack.c.l.b16 %v1116
    %v1158 = vunpack.c.h.b16 %v1116
    %v1159 = vunpack.c.l.b16 %v1117
    %v1160 = vunpack.c.h.b16 %v1117
    %v1161 = vunpack.c.l.b16 %v1118
    %v1162 = vunpack.c.h.b16 %v1118
    %v1163 = vunpack.c.l.b16 %v1119
    %v1164 = vunpack.c.h.b16 %v1119
    %v1165 = vunpack.c.l.b16 %v1120
    %v1166 = vunpack.c.h.b16 %v1120
    %v1167 = vunpack.c.l.b16 %v1121
    %v1168 = vunpack.c.h.b16 %v1121
    %v1169 = vunpack.c.l.b16 %v1122
    %v1170 = vunpack.c.h.b16 %v1122
    %v1171 = vpack.c.b16 %v1141, %v1139
    %v1172 = vpack.c.b16 %v1142, %v1140
    %v1173 = vpack.c.b16 %v1145, %v1143
    %v1174 = vpack.c.b16 %v1146, %v1144
    %v1175 = vpack.c.b16 %v1149, %v1147
    %v1176 = vpack.c.b16 %v1150, %v1148
    %v1177 = vpack.c.b16 %v1153, %v1151
    %v1178 = vpack.c.b16 %v1154, %v1152
    %v1179 = vpack.c.b16 %v1157, %v1155
    %v1180 = vpack.c.b16 %v1158, %v1156
    %v1181 = vpack.c.b16 %v1161, %v1159
    %v1182 = vpack.c.b16 %v1162, %v1160
    %v1183 = vpack.c.b16 %v1165, %v1163
    %v1184 = vpack.c.b16 %v1166, %v1164
    %v1185 = vpack.c.b16 %v1169, %v1167
    %v1186 = vpack.c.b16 %v1170, %v1168
    %1203 = vmatprep.subr.bf16.mxu0 %v1172
    %1204 = vmatpush1.bf16.msra.mxu0 %v1171
    %1205 = vmatprep.subr.bf16.mxu0 %v1174
    %1206 = vmatpush1.bf16.msra.mxu0 %v1173
    %1207 = vmatprep.subr.bf16.mxu0 %v1176
    %1208 = vmatpush1.bf16.msra.mxu0 %v1175
    %1209 = vmatprep.subr.bf16.mxu0 %v1178
    %1210 = vmatpush1.bf16.msra.mxu0 %v1177
    %1211 = vmatprep.subr.bf16.mxu0 %v1180
    %1212 = vmatpush1.bf16.msra.mxu0 %v1179
    %1213 = vmatprep.subr.bf16.mxu0 %v1182
    %1214 = vmatpush1.bf16.msra.mxu0 %v1181
    %1215 = vmatprep.subr.bf16.mxu0 %v1184
    %1216 = vmatpush1.bf16.msra.mxu0 %v1183
    %1217 = vmatprep.subr.bf16.mxu0 %v1186
    %1218 = vmatpush1.bf16.msra.mxu0 %v1185
    %1219 = vmatprep.subr.bf16.mxu0 0
    %1220 = vmatpush1.bf16.msra.mxu0 0
    %1221 = vmatprep.subr.bf16.mxu0 0
    %1222 = vmatpush1.bf16.msra.mxu0 0
    %1223 = vmatprep.subr.bf16.mxu0 0
    %1224 = vmatpush1.bf16.msra.mxu0 0
    %1225 = vmatprep.subr.bf16.mxu0 0
    %1226 = vmatpush1.bf16.msra.mxu0 0
    %1227 = vmatprep.subr.bf16.mxu0 0
    %1228 = vmatpush1.bf16.msra.mxu0 0
    %1229 = vmatprep.subr.bf16.mxu0 0
    %1230 = vmatpush1.bf16.msra.mxu0 0
    %1231 = vmatprep.subr.bf16.mxu0 0
    %1232 = vmatpush1.bf16.msra.mxu0 0
    %1233 = vmatprep.subr.bf16.mxu0 0
    %1234 = vmatpush1.bf16.msra.mxu0 0
    %1235 = vmatprep.mubr.bf16.mxu0 0
    %1236 = vmatmul.mubr.bf16.gmra.mrb[0].mxu0 %v1106
    %v1237 = vpop.f32.mrb[0].mxu0
    %v1238 = vadd.f32 0.0, %v1237
    %v1239 = vpop.f32.mrb[0].mxu0
    %v1240 = vpop.f32.mrb[0].mxu0
    %v1241 = vpop.f32.mrb[0].mxu0
    %v1242 = vadd.f32 0.0, %v1241
    %1243 = vdwg.mxu0
    %v1244 = vrot.slane %v1238, 4
    %v1245 = vadd.f32 %v1238, %v1244
    %v1246 = vrot.slane %v1245, 2
    %v1247 = vadd.f32 %v1245, %v1246
    %v1248 = vrot.slane %v1247, 1
    %v1249 = vadd.f32 %v1247, %v1248
    %v1250 = vmul.f32 %v1249, 0.5
    %v1251 = vsub.f32 %v1238, %v1250
    %v1252 = vmul.f32 %v1251, %v1251
    %v1253 = vrot.slane %v1252, 4
    %v1254 = vadd.f32 %v1252, %v1253
    %v1255 = vrot.slane %v1254, 2
    %v1256 = vadd.f32 %v1254, %v1255
    %v1257 = vrot.slane %v1256, 1
    %v1258 = vadd.f32 %v1256, %v1257
    %v1259 = vmul.f32 %v1258, 0.5
    %v1260 = vmul.f32 %v1250, %v1250
    %v1261 = vmul.f32 %v1260, 3.0
    %v1262 = vsub.f32 %v1259, %v1261
    %v1263 = vmax.f32 %v1262, 0.0
    %v1264 = vadd.f32 %v1263, 1e-05
    %v1265 = vrsqrt.pop %v1264
    %v1266 = vmul.f32 %v1251, %v1265
    %v1267 = vmul.f32 %v1266, %v133
    %v1268 = vadd.f32 %v1267, %v134
    %v1269 = vmax.f32 %v1268, 0.0
    %v1270 = vrot.slane %v1242, 4
    %v1271 = vadd.f32 %v1242, %v1270
    %v1272 = vrot.slane %v1271, 2
    %v1273 = vadd.f32 %v1271, %v1272
    %v1274 = vrot.slane %v1273, 1
    %v1275 = vadd.f32 %v1273, %v1274
    %v1276 = vmul.f32 %v1275, 0.5
    %v1277 = vsub.f32 %v1242, %v1276
    %v1278 = vmul.f32 %v1277, %v1277
    %v1279 = vrot.slane %v1278, 4
    %v1280 = vadd.f32 %v1278, %v1279
    %v1281 = vrot.slane %v1280, 2
    %v1282 = vadd.f32 %v1280, %v1281
    %v1283 = vrot.slane %v1282, 1
    %v1284 = vadd.f32 %v1282, %v1283
    %v1285 = vmul.f32 %v1284, 0.5
    %v1286 = vmul.f32 %v1276, %v1276
    %v1287 = vmul.f32 %v1286, 3.0
    %v1288 = vsub.f32 %v1285, %v1287
    %v1289 = vmax.f32 %v1288, 0.0
    %v1290 = vadd.f32 %v1289, 1e-05
    %v1291 = vrsqrt.pop %v1290
    %v1292 = vmul.f32 %v1277, %v1291
    %v1293 = vmul.f32 %v1292, %v129
    %v1294 = vadd.f32 %v1293, %v130
    %v1295 = vmul.f32 %v1294, 0.5
    %v1296 = vtanh.pop %v1295
    %v1297 = vmul.f32 %v1296, 0.5
    %v1298 = vadd.f32 %v1297, 0.5
    %v1299 = vmul.f32 %v1269, %v1298
    %v1300 = vpack.c.bf16 %v1299, %v1299
    %v1301 = vld [vmem:[#allocation11] sm:$0xf]
    %v1302 = vld [vmem:[#allocation11 + $0x4] sm:$0xf]
    %v1303 = vld [vmem:[#allocation11 + $0x8] sm:$0xf]
    %v1304 = vld [vmem:[#allocation11 + $0xc] sm:$0xf]
    %v1305 = vld [vmem:[#allocation11 + $0x10] sm:$0xf]
    %v1306 = vld [vmem:[#allocation11 + $0x14] sm:$0xf]
    %v1307 = vld [vmem:[#allocation11 + $0x18] sm:$0xf]
    %v1308 = vld [vmem:[#allocation11 + $0x1c] sm:$0xf]
    %v1309 = vld [vmem:[#allocation11 + $0x20] sm:$0xf]
    %v1310 = vld [vmem:[#allocation11 + $0x24] sm:$0xf]
    %v1311 = vld [vmem:[#allocation11 + $0x28] sm:$0xf]
    %v1312 = vld [vmem:[#allocation11 + $0x2c] sm:$0xf]
    %v1313 = vld [vmem:[#allocation11 + $0x30] sm:$0xf]
    %v1314 = vld [vmem:[#allocation11 + $0x34] sm:$0xf]
    %v1315 = vld [vmem:[#allocation11 + $0x38] sm:$0xf]
    %v1316 = vld [vmem:[#allocation11 + $0x3c] sm:$0xf]
    %v1333 = vunpack.c.l.b16 %v1301
    %v1334 = vunpack.c.l.b16 %v1302
    %v1335 = vunpack.c.l.b16 %v1303
    %v1336 = vunpack.c.l.b16 %v1304
    %v1337 = vunpack.c.l.b16 %v1305
    %v1338 = vunpack.c.l.b16 %v1306
    %v1339 = vunpack.c.l.b16 %v1307
    %v1340 = vunpack.c.l.b16 %v1308
    %v1341 = vunpack.c.l.b16 %v1309
    %v1342 = vunpack.c.l.b16 %v1310
    %v1343 = vunpack.c.l.b16 %v1311
    %v1344 = vunpack.c.l.b16 %v1312
    %v1345 = vunpack.c.l.b16 %v1313
    %v1346 = vunpack.c.l.b16 %v1314
    %v1347 = vunpack.c.l.b16 %v1315
    %v1348 = vunpack.c.l.b16 %v1316
    %v1349 = vpack.c.b16 %v1334, %v1333
    %v1350 = vpack.c.b16 %v1336, %v1335
    %v1351 = vpack.c.b16 %v1338, %v1337
    %v1352 = vpack.c.b16 %v1340, %v1339
    %v1353 = vpack.c.b16 %v1342, %v1341
    %v1354 = vpack.c.b16 %v1344, %v1343
    %v1355 = vpack.c.b16 %v1346, %v1345
    %v1356 = vpack.c.b16 %v1348, %v1347
    %1365 = vmatprep.subr.bf16.mxu0 0
    %1366 = vmatpush1.bf16.msra.mxu0 %v1349
    %1367 = vmatprep.subr.bf16.mxu0 0
    %1368 = vmatpush1.bf16.msra.mxu0 %v1350
    %1369 = vmatprep.subr.bf16.mxu0 0
    %1370 = vmatpush1.bf16.msra.mxu0 %v1351
    %1371 = vmatprep.subr.bf16.mxu0 0
    %1372 = vmatpush1.bf16.msra.mxu0 %v1352
    %1373 = vmatprep.subr.bf16.mxu0 0
    %1374 = vmatpush1.bf16.msra.mxu0 %v1353
    %1375 = vmatprep.subr.bf16.mxu0 0
    %1376 = vmatpush1.bf16.msra.mxu0 %v1354
    %1377 = vmatprep.subr.bf16.mxu0 0
    %1378 = vmatpush1.bf16.msra.mxu0 %v1355
    %1379 = vmatprep.subr.bf16.mxu0 0
    %1380 = vmatpush1.bf16.msra.mxu0 %v1356
    %1381 = vmatprep.subr.bf16.mxu0 0
    %1382 = vmatpush1.bf16.msra.mxu0 0
    %1383 = vmatprep.subr.bf16.mxu0 0
    %1384 = vmatpush1.bf16.msra.mxu0 0
    %1385 = vmatprep.subr.bf16.mxu0 0
    %1386 = vmatpush1.bf16.msra.mxu0 0
    %1387 = vmatprep.subr.bf16.mxu0 0
    %1388 = vmatpush1.bf16.msra.mxu0 0
    %1389 = vmatprep.subr.bf16.mxu0 0
    %1390 = vmatpush1.bf16.msra.mxu0 0
    %1391 = vmatprep.subr.bf16.mxu0 0
    %1392 = vmatpush1.bf16.msra.mxu0 0
    %1393 = vmatprep.subr.bf16.mxu0 0
    %1394 = vmatpush1.bf16.msra.mxu0 0
    %1395 = vmatprep.subr.bf16.mxu0 0
    %1396 = vmatpush1.bf16.msra.mxu0 0
    %1397 = vmatprep.mubr.bf16.mxu0 0
    %1398 = vmatmul.mubr.bf16.gmra.mrb[0].mxu0 %v1300
    %v1399 = vpop.f32.mrb[0].mxu0
    %v1400 = vadd.f32 0.0, %v1399
    %v1401 = vpop.f32.mrb[0].mxu0
    %v1402 = vpop.f32.mrb[0].mxu0
    %v1403 = vpop.f32.mrb[0].mxu0
    %1404 = vdwg.mxu0
    %1405 = vst [vmem:[#allocation14] sm:$0xff] %v1400
    // Predicated region
    $region58: #{tpu_custom_call.1} parent=1 // pred_check
      _
    $region59: #{tpu_custom_call.1} parent=1 // pred_check_branch
      %1407 = sbr.rel (0) target = $region61
    $region60: #{tpu_custom_call.1} parent=1 // pred_region
      %s1409 = ssub.s32 128, 128
      %1410 = vsyncadd [#allocation4], %s1409
      %s1412 = sshll.u32 [#allocation14], 4
      %s1413 = int_to_ptr.vmem [resolvable:$true] %s1412
      %1415 = dma.vmem_to_hbm [thread:$0]  %s1413, 128, %s7, [#allocation4]
    $region61: #{tpu_custom_call.1} parent=1 // pred_fallthru
      _
    // Predicated region
    $region62: #{tpu_custom_call.1} parent=1 // pred_check
      _
    $region63: #{tpu_custom_call.1} parent=1 // pred_check_branch
      %1417 = sbr.rel (0) target = $region65
    $region64: #{tpu_custom_call.1} parent=1 // pred_region
      %1418 = dma.done [#allocation4], 128
    $region65: #{tpu_custom_call.1} parent=1 // pred_fallthru
      _
    %1419 = vsyncpa [#allocation3], 1
    %1420 = vsyncpa [#allocation6], 1
    %1421 = vsyncpa [#allocation9], 1
    %1422 = vsyncpa [#allocation12], 1
    %1423 = vsyncpa [#allocation4], 1

</llo_original>
